<compile_context>
chip_gen: v7x
topology: tpu7x:2x2x1
jax: 0.10.0
libtpu: 0.0.40
codegen_flags: <defaults>
</compile_context>

<pallas_src>
import functools

import jax
import jax.numpy as jnp
from jax import lax
from jax.experimental import pallas as pl
from jax.experimental.pallas import tpu as pltpu

H = 128            # hidden size
G = 4 * H          # gate width (i, f, g, o)
OUT = 21           # Linear(128, 21)
OUT_PAD = 128      # lane-dense padded head width
MAX_CHUNK_T = 256  # time-steps of x kept VMEM-resident per grid step (block = chunk_T * 4 KiB)


def lstm_head_kernel(x_ref,       # (Tc, B_pad, 1) f32  raw input chunk
                     wih_ref,     # (1, 4H)  f32  W_ih row (input_size == 1)
                     bias_ref,    # (1, 4H)  f32  b_ih + b_hh
                     whh_if_ref,  # (H, 2H)  bf16 W_hh^T, i|f gate half
                     whh_go_ref,  # (H, 2H)  bf16 W_hh^T, g|o gate half
                     lw_ref,      # (H, 128) f32  Linear weight^T, zero-padded 21 -> 128
                     lb_ref,      # (1, 128) f32  Linear bias, zero-padded
                     out_ref,     # (B_pad, 128) f32
                     h_sc,        # VMEM (B_pad, H) bf16  hidden carried across chunks
                     c_sc,        # VMEM (B_pad, H) f32   cell carried across chunks
                     *, total_T, chunk_T):
    chunk = pl.program_id(0)
    nchunks = pl.num_programs(0)
    B_pad = x_ref.shape[1]

    # h_0 = c_0 = 0 (PyTorch default when no initial state is passed).
    @pl.when(chunk == 0)
    def _():
        h_sc[...] = jnp.zeros_like(h_sc)
        c_sc[...] = jnp.zeros_like(c_sc)

    # Small per-chunk constants, broadcast once (hoisted out of the step loop; ~8 vregs).
    wih_b = jnp.broadcast_to(wih_ref[...], (B_pad, G))
    bias_b = jnp.broadcast_to(bias_ref[...], (B_pad, G))

    h0 = h_sc[...]                 # (B_pad, H) bf16
    c0 = c_sc[...]                 # (B_pad, H) f32

    def cell(t, h, c):
        # Input projection (input_size == 1): VPU work, off the serial h->h critical path.
        pre = x_ref[t] * wih_b + bias_b                                  # (B_pad, 4H) f32
        # Recurrent matmul, split so the i|f half can pop / start the EUP while the g|o
        # half is still in flight.  W_hh stays in VMEM (never hoisted into vregs).
        acc_if = jnp.dot(h, whh_if_ref[...], preferred_element_type=jnp.float32)
        acc_go = jnp.dot(h, whh_go_ref[...], preferred_element_type=jnp.float32)
        g_if = pre[:, :2 * H] + acc_if
        g_go = pre[:, 2 * H:] + acc_go
        # PyTorch gate order: i, f, g, o
        i_g = jax.nn.sigmoid(g_if[:, :H])
        f_g = jax.nn.sigmoid(g_if[:, H:])
        g_g = jnp.tanh(g_go[:, :H])
        o_g = jax.nn.sigmoid(g_go[:, H:])
        c_new = f_g * c + i_g * g_g
        h_new = (o_g * jnp.tanh(c_new)).astype(jnp.bfloat16)            # bf16 carry
        return h_new, c_new

    unroll = True if chunk_T <= 64 else 8

    if total_T % chunk_T == 0:
        def step(t, carry):
            h, c = carry
            return cell(t, h, c)
        h, c = lax.fori_loop(0, chunk_T, step, (h0, c0), unroll=unroll)
    else:
        # Partial last chunk: same unrolled code path + two cheap VPU selects per step
        # (padded timesteps of x are zeros and their updates are discarded).
        valid = jnp.minimum(chunk_T, total_T - chunk * chunk_T)

        def step(t, carry):
            h, c = carry
            h_new, c_new = cell(t, h, c)
            keep = t < valid
            return jnp.where(keep, h_new, h), jnp.where(keep, c_new, c)
        h, c = lax.fori_loop(0, chunk_T, step, (h0, c0), unroll=unroll)

    h_sc[...] = h
    c_sc[...] = c

    # Head (final chunk only): tanh(h_T) @ W_l1^T + b_l1, lane-dense 128-wide output block.
    @pl.when(chunk == nchunks - 1)
    def _():
        ht = jnp.tanh(h.astype(jnp.float32))
        out = jnp.dot(ht, lw_ref[...], preferred_element_type=jnp.float32) + lb_ref[...]
        out_ref[...] = out.astype(out_ref.dtype)


@jax.jit
def lstm_net_forward(x, params):
    """x: (B, T, 1) float32 (batch_first, like the PyTorch module). Returns (B, 21)."""
    B, T, _ = x.shape
    B_pad = ((B + 7) // 8) * 8                 # f32 sublane-dense batch
    if T <= MAX_CHUNK_T:
        chunk_T, num_chunks = T, 1
    else:
        chunk_T = MAX_CHUNK_T
        num_chunks = -(-T // chunk_T)
    T_pad = num_chunks * chunk_T

    # Raw input streamed as (T_pad, B_pad, 1); input projection happens in-kernel.
    x_tb1 = jnp.transpose(x, (1, 0, 2)).astype(jnp.float32)                  # (T, B, 1)
    x_tb1 = jnp.pad(x_tb1, ((0, T_pad - T), (0, B_pad - B), (0, 0)))         # (T_pad, B_pad, 1)

    wih_row = params["w_ih_l0"].reshape(1, G).astype(jnp.float32)            # (1, 4H)
    bias_row = (params["b_ih_l0"] + params["b_hh_l0"]).reshape(1, G).astype(jnp.float32)
    whh_t = params["w_hh_l0"].T.astype(jnp.bfloat16)                         # (H, 4H)
    whh_if = whh_t[:, :2 * H]                                                # (H, 2H) i|f
    whh_go = whh_t[:, 2 * H:]                                                # (H, 2H) g|o
    l1_wT = jnp.pad(params["l1_w"].T.astype(jnp.float32),
                    ((0, 0), (0, OUT_PAD - OUT)))                            # (H, 128)
    l1_b = jnp.pad(params["l1_b"].astype(jnp.float32),
                   (0, OUT_PAD - OUT)).reshape(1, OUT_PAD)                   # (1, 128)

    kernel = functools.partial(lstm_head_kernel, total_T=T, chunk_T=chunk_T)
    out_pad = pl.pallas_call(
        kernel,
        out_shape=jax.ShapeDtypeStruct((B_pad, OUT_PAD), jnp.float32),
        grid=(num_chunks,),
        in_specs=[
            pl.BlockSpec((chunk_T, B_pad, 1), lambda c: (c, 0, 0)),  # streamed x chunk
            pl.BlockSpec((1, G), lambda c: (0, 0)),                  # W_ih row
            pl.BlockSpec((1, G), lambda c: (0, 0)),                  # b_ih + b_hh
            pl.BlockSpec((H, 2 * H), lambda c: (0, 0)),              # W_hh^T i|f (constant block)
            pl.BlockSpec((H, 2 * H), lambda c: (0, 0)),              # W_hh^T g|o (constant block)
            pl.BlockSpec((H, OUT_PAD), lambda c: (0, 0)),            # Linear W^T (padded)
            pl.BlockSpec((1, OUT_PAD), lambda c: (0, 0)),            # Linear b (padded)
        ],
        out_specs=pl.BlockSpec((B_pad, OUT_PAD), lambda c: (0, 0)),
        scratch_shapes=[
            pltpu.VMEM((B_pad, H), jnp.bfloat16),  # h carried across chunks
            pltpu.VMEM((B_pad, H), jnp.float32),   # c carried across chunks
        ],
        compiler_params=pltpu.CompilerParams(
            dimension_semantics=("arbitrary",)),   # serial recurrence over time chunks
    )(x_tb1, wih_row, bias_row, whh_if, whh_go, l1_wT, l1_b)
    return out_pad[:B, :OUT]


def reference_forward(x, params):
    """Pure-JAX f32 reference matching torch semantics (layer-0 LSTM + tanh + linear)."""
    B, T, _ = x.shape
    w_ih = params["w_ih_l0"]      # (4H, 1)
    w_hh = params["w_hh_l0"]      # (4H, H)
    b = params["b_ih_l0"] + params["b_hh_l0"]

    def step(carry, x_t):
        h, c = carry
        gates = x_t @ w_ih.T + h @ w_hh.T + b
        i = jax.nn.sigmoid(gates[:, 0 * H:1 * H])
        f = jax.nn.sigmoid(gates[:, 1 * H:2 * H])
        g = jnp.tanh(gates[:, 2 * H:3 * H])
        o = jax.nn.sigmoid(gates[:, 3 * H:4 * H])
        c = f * c + i * g
        h = o * jnp.tanh(c)
        return (h, c), None

    h0 = jnp.zeros((B, H), jnp.float32)
    c0 = jnp.zeros((B, H), jnp.float32)
    (h_final, _), _ = lax.scan(step, (h0, c0), jnp.transpose(x, (1, 0, 2)))
    ht = jnp.tanh(h_final)
    return ht @ params["l1_w"].T + params["l1_b"]


def init_params(key):
    """Deterministic init mirroring the PyTorch module's live parameter shapes.

    NOTE: the module output depends only on h_n[0] (layer-0 final hidden state), so the
    layer-1 LSTM parameters are dead w.r.t. the forward output and are intentionally omitted.
    """
    k = 1.0 / jnp.sqrt(H)
    keys = jax.random.split(key, 7)
    u = lambda kk, shape: jax.random.uniform(kk, shape, jnp.float32, -k, k)
    return {
        "w_ih_l0": u(keys[0], (G, 1)),
        "w_hh_l0": u(keys[1], (G, H)),
        "b_ih_l0": u(keys[2], (G,)),
        "b_hh_l0": u(keys[3], (G,)),
        "l1_w": u(keys[4], (OUT, H)),
        "l1_b": u(keys[5], (OUT,)),
    }


if __name__ == "__main__":
    key = jax.random.PRNGKey(0)
    pkey, xkey = jax.random.split(key)
    params = init_params(pkey)

    B, T = 2, 8
    x = jax.random.normal(xkey, (B, T, 1), jnp.float32)

    out = jax.block_until_ready(lstm_net_forward(x, params))
    ref = reference_forward(x, params)

    assert out.shape == (B, OUT), out.shape
    max_err = float(jnp.max(jnp.abs(out - ref)))
    assert jnp.allclose(out, ref, atol=2e-2, rtol=2e-2), max_err

    print("KERNEL_OK")
</pallas_src>

<mosaic_0001>
module attributes {stable_mosaic.version = 11 : i64} {
  func.func @lstm_head_kernel(%arg0: i32, %arg1: memref<8x8x1xf32, #tpu.memory_space<vmem>>, %arg2: memref<1x512xf32, #tpu.memory_space<vmem>>, %arg3: memref<1x512xf32, #tpu.memory_space<vmem>>, %arg4: memref<128x256xbf16, #tpu.memory_space<vmem>>, %arg5: memref<128x256xbf16, #tpu.memory_space<vmem>>, %arg6: memref<128x128xf32, #tpu.memory_space<vmem>>, %arg7: memref<1x128xf32, #tpu.memory_space<vmem>>, %arg8: memref<8x128xf32, #tpu.memory_space<vmem>>, %arg9: memref<8x128xbf16, #tpu.memory_space<vmem>>, %arg10: memref<8x128xf32, #tpu.memory_space<vmem>>) attributes {dimension_semantics = [#tpu.dimension_semantics<arbitrary>], iteration_bounds = array<i64: 1>, scalar_prefetch = 0 : i64, scratch_operands = 2 : i64, tpu.core_type = #tpu.core_type<tc>, window_params = [{transform_indices = @transform_0, window_bounds = array<i64: 8, 8, 1>}, {pipeline_mode = #tpu.pipeline_mode<synchronous>, transform_indices = @transform_1, window_bounds = array<i64: 1, 512>}, {pipeline_mode = #tpu.pipeline_mode<synchronous>, transform_indices = @transform_2, window_bounds = array<i64: 1, 512>}, {pipeline_mode = #tpu.pipeline_mode<synchronous>, transform_indices = @transform_3, window_bounds = array<i64: 128, 256>}, {pipeline_mode = #tpu.pipeline_mode<synchronous>, transform_indices = @transform_4, window_bounds = array<i64: 128, 256>}, {pipeline_mode = #tpu.pipeline_mode<synchronous>, transform_indices = @transform_5, window_bounds = array<i64: 128, 128>}, {pipeline_mode = #tpu.pipeline_mode<synchronous>, transform_indices = @transform_6, window_bounds = array<i64: 1, 128>}, {pipeline_mode = #tpu.pipeline_mode<synchronous>, transform_indices = @transform_7, window_bounds = array<i64: 8, 128>}]} {
    %c0_i32 = arith.constant 0 : i32
    %0 = arith.cmpi eq, %arg0, %c0_i32 : i32
    %1 = arith.extui %0 : i1 to i32
    %c0_i32_0 = arith.constant 0 : i32
    %2 = arith.cmpi ne, %1, %c0_i32_0 : i32
    scf.if %2 {
      %cst_102 = arith.constant 0.000000e+00 : bf16
      %336 = vector.broadcast %cst_102 : bf16 to vector<8x128xbf16>
      %c0_103 = arith.constant 0 : index
      %c0_104 = arith.constant 0 : index
      %337 = vector.load %arg9[%c0_103, %c0_104] : memref<8x128xbf16, #tpu.memory_space<vmem>>, vector<8x128xbf16>
      tpu.vector_store %arg9[%c0_103, %c0_104], %336 {strides = array<i32>} : memref<8x128xbf16, #tpu.memory_space<vmem>>, vector<8x128xbf16>,
      %cst_105 = arith.constant 0.000000e+00 : f32
      %338 = vector.broadcast %cst_105 : f32 to vector<8x128xf32>
      %c0_106 = arith.constant 0 : index
      %c0_107 = arith.constant 0 : index
      %339 = vector.load %arg10[%c0_106, %c0_107] : memref<8x128xf32, #tpu.memory_space<vmem>>, vector<8x128xf32>
      tpu.vector_store %arg10[%c0_106, %c0_107], %338 {strides = array<i32>} : memref<8x128xf32, #tpu.memory_space<vmem>>, vector<8x128xf32>,
    } else {
    }
    %c0 = arith.constant 0 : index
    %c0_1 = arith.constant 0 : index
    %3 = vector.load %arg2[%c0, %c0_1] : memref<1x512xf32, #tpu.memory_space<vmem>>, vector<1x512xf32>
    %4 = vector.shape_cast %3 : vector<1x512xf32> to vector<1x512xf32>
    %5 = vector.broadcast %4 : vector<1x512xf32> to vector<8x512xf32>
    %c0_2 = arith.constant 0 : index
    %c0_3 = arith.constant 0 : index
    %6 = vector.load %arg3[%c0_2, %c0_3] : memref<1x512xf32, #tpu.memory_space<vmem>>, vector<1x512xf32>
    %7 = vector.shape_cast %6 : vector<1x512xf32> to vector<1x512xf32>
    %8 = vector.broadcast %7 : vector<1x512xf32> to vector<8x512xf32>
    %c0_4 = arith.constant 0 : index
    %c0_5 = arith.constant 0 : index
    %9 = vector.load %arg9[%c0_4, %c0_5] : memref<8x128xbf16, #tpu.memory_space<vmem>>, vector<8x128xbf16>
    %c0_6 = arith.constant 0 : index
    %c0_7 = arith.constant 0 : index
    %10 = vector.load %arg10[%c0_6, %c0_7] : memref<8x128xf32, #tpu.memory_space<vmem>>, vector<8x128xf32>
    %c0_i32_8 = arith.constant 0 : i32
    %11 = arith.index_cast %c0_i32_8 : i32 to index
    %c0_9 = arith.constant 0 : index
    %c0_10 = arith.constant 0 : index
    %12 = vector.load %arg1[%11, %c0_9, %c0_10] : memref<8x8x1xf32, #tpu.memory_space<vmem>>, vector<1x8x1xf32>
    %13 = vector.shape_cast %12 : vector<1x8x1xf32> to vector<8x1xf32>
    %14 = vector.broadcast %13 : vector<8x1xf32> to vector<8x512xf32>
    %15 = arith.mulf %14, %5 : vector<8x512xf32>
    %16 = arith.addf %15, %8 : vector<8x512xf32>
    %c0_11 = arith.constant 0 : index
    %c0_12 = arith.constant 0 : index
    %17 = vector.load %arg4[%c0_11, %c0_12] : memref<128x256xbf16, #tpu.memory_space<vmem>>, vector<128x256xbf16>
    %cst = arith.constant dense<0.000000e+00> : vector<8x256xf32>
    %18 = tpu.matmul %9, %17, %cst {dimension_numbers = #tpu.dot_dimension_numbers<[1], [0], [0], [1], [0, 0, 1, 1], [], []>} : vector<8x128xbf16>, vector<128x256xbf16>, vector<8x256xf32> -> vector<8x256xf32>
    %c0_13 = arith.constant 0 : index
    %c0_14 = arith.constant 0 : index
    %19 = vector.load %arg5[%c0_13, %c0_14] : memref<128x256xbf16, #tpu.memory_space<vmem>>, vector<128x256xbf16>
    %cst_15 = arith.constant dense<0.000000e+00> : vector<8x256xf32>
    %20 = tpu.matmul %9, %19, %cst_15 {dimension_numbers = #tpu.dot_dimension_numbers<[1], [0], [0], [1], [0, 0, 1, 1], [], []>} : vector<8x128xbf16>, vector<128x256xbf16>, vector<8x256xf32> -> vector<8x256xf32>
    %21 = vector.extract_strided_slice %16 {offsets = [0, 0], sizes = [8, 256], strides = [1, 1]} : vector<8x512xf32> to vector<8x256xf32>
    %22 = arith.addf %21, %18 : vector<8x256xf32>
    %23 = vector.extract_strided_slice %16 {offsets = [0, 256], sizes = [8, 256], strides = [1, 1]} : vector<8x512xf32> to vector<8x256xf32>
    %24 = arith.addf %23, %20 : vector<8x256xf32>
    %25 = vector.extract_strided_slice %22 {offsets = [0, 0], sizes = [8, 128], strides = [1, 1]} : vector<8x256xf32> to vector<8x128xf32>
    %26 = arith.negf %25 : vector<8x128xf32>
    %27 = math.exp %26 : vector<8x128xf32>
    %cst_16 = arith.constant 1.000000e+00 : f32
    %28 = vector.broadcast %cst_16 : f32 to vector<8x128xf32>
    %29 = arith.addf %28, %27 : vector<8x128xf32>
    %30 = arith.divf %28, %29 : vector<8x128xf32>
    %31 = vector.extract_strided_slice %22 {offsets = [0, 128], sizes = [8, 128], strides = [1, 1]} : vector<8x256xf32> to vector<8x128xf32>
    %32 = arith.negf %31 : vector<8x128xf32>
    %33 = math.exp %32 : vector<8x128xf32>
    %cst_17 = arith.constant 1.000000e+00 : f32
    %34 = vector.broadcast %cst_17 : f32 to vector<8x128xf32>
    %35 = arith.addf %34, %33 : vector<8x128xf32>
    %36 = arith.divf %34, %35 : vector<8x128xf32>
    %37 = vector.extract_strided_slice %24 {offsets = [0, 0], sizes = [8, 128], strides = [1, 1]} : vector<8x256xf32> to vector<8x128xf32>
    %38 = math.tanh %37 : vector<8x128xf32>
    %39 = vector.extract_strided_slice %24 {offsets = [0, 128], sizes = [8, 128], strides = [1, 1]} : vector<8x256xf32> to vector<8x128xf32>
    %40 = arith.negf %39 : vector<8x128xf32>
    %41 = math.exp %40 : vector<8x128xf32>
    %cst_18 = arith.constant 1.000000e+00 : f32
    %42 = vector.broadcast %cst_18 : f32 to vector<8x128xf32>
    %43 = arith.addf %42, %41 : vector<8x128xf32>
    %44 = arith.divf %42, %43 : vector<8x128xf32>
    %45 = arith.mulf %36, %10 : vector<8x128xf32>
    %46 = arith.mulf %30, %38 : vector<8x128xf32>
    %47 = arith.addf %45, %46 : vector<8x128xf32>
    %48 = math.tanh %47 : vector<8x128xf32>
    %49 = arith.mulf %44, %48 : vector<8x128xf32>
    %50 = arith.truncf %49 : vector<8x128xf32> to vector<8x128xbf16>
    %c1_i32 = arith.constant 1 : i32
    %51 = arith.index_cast %c1_i32 : i32 to index
    %c0_19 = arith.constant 0 : index
    %c0_20 = arith.constant 0 : index
    %52 = vector.load %arg1[%51, %c0_19, %c0_20] : memref<8x8x1xf32, #tpu.memory_space<vmem>>, vector<1x8x1xf32>
    %53 = vector.shape_cast %52 : vector<1x8x1xf32> to vector<8x1xf32>
    %54 = vector.broadcast %53 : vector<8x1xf32> to vector<8x512xf32>
    %55 = arith.mulf %54, %5 : vector<8x512xf32>
    %56 = arith.addf %55, %8 : vector<8x512xf32>
    %c0_21 = arith.constant 0 : index
    %c0_22 = arith.constant 0 : index
    %57 = vector.load %arg4[%c0_21, %c0_22] : memref<128x256xbf16, #tpu.memory_space<vmem>>, vector<128x256xbf16>
    %cst_23 = arith.constant dense<0.000000e+00> : vector<8x256xf32>
    %58 = tpu.matmul %50, %57, %cst_23 {dimension_numbers = #tpu.dot_dimension_numbers<[1], [0], [0], [1], [0, 0, 1, 1], [], []>} : vector<8x128xbf16>, vector<128x256xbf16>, vector<8x256xf32> -> vector<8x256xf32>
    %c0_24 = arith.constant 0 : index
    %c0_25 = arith.constant 0 : index
    %59 = vector.load %arg5[%c0_24, %c0_25] : memref<128x256xbf16, #tpu.memory_space<vmem>>, vector<128x256xbf16>
    %cst_26 = arith.constant dense<0.000000e+00> : vector<8x256xf32>
    %60 = tpu.matmul %50, %59, %cst_26 {dimension_numbers = #tpu.dot_dimension_numbers<[1], [0], [0], [1], [0, 0, 1, 1], [], []>} : vector<8x128xbf16>, vector<128x256xbf16>, vector<8x256xf32> -> vector<8x256xf32>
    %61 = vector.extract_strided_slice %56 {offsets = [0, 0], sizes = [8, 256], strides = [1, 1]} : vector<8x512xf32> to vector<8x256xf32>
    %62 = arith.addf %61, %58 : vector<8x256xf32>
    %63 = vector.extract_strided_slice %56 {offsets = [0, 256], sizes = [8, 256], strides = [1, 1]} : vector<8x512xf32> to vector<8x256xf32>
    %64 = arith.addf %63, %60 : vector<8x256xf32>
    %65 = vector.extract_strided_slice %62 {offsets = [0, 0], sizes = [8, 128], strides = [1, 1]} : vector<8x256xf32> to vector<8x128xf32>
    %66 = arith.negf %65 : vector<8x128xf32>
    %67 = math.exp %66 : vector<8x128xf32>
    %cst_27 = arith.constant 1.000000e+00 : f32
    %68 = vector.broadcast %cst_27 : f32 to vector<8x128xf32>
    %69 = arith.addf %68, %67 : vector<8x128xf32>
    %70 = arith.divf %68, %69 : vector<8x128xf32>
    %71 = vector.extract_strided_slice %62 {offsets = [0, 128], sizes = [8, 128], strides = [1, 1]} : vector<8x256xf32> to vector<8x128xf32>
    %72 = arith.negf %71 : vector<8x128xf32>
    %73 = math.exp %72 : vector<8x128xf32>
    %cst_28 = arith.constant 1.000000e+00 : f32
    %74 = vector.broadcast %cst_28 : f32 to vector<8x128xf32>
    %75 = arith.addf %74, %73 : vector<8x128xf32>
    %76 = arith.divf %74, %75 : vector<8x128xf32>
    %77 = vector.extract_strided_slice %64 {offsets = [0, 0], sizes = [8, 128], strides = [1, 1]} : vector<8x256xf32> to vector<8x128xf32>
    %78 = math.tanh %77 : vector<8x128xf32>
    %79 = vector.extract_strided_slice %64 {offsets = [0, 128], sizes = [8, 128], strides = [1, 1]} : vector<8x256xf32> to vector<8x128xf32>
    %80 = arith.negf %79 : vector<8x128xf32>
    %81 = math.exp %80 : vector<8x128xf32>
    %cst_29 = arith.constant 1.000000e+00 : f32
    %82 = vector.broadcast %cst_29 : f32 to vector<8x128xf32>
    %83 = arith.addf %82, %81 : vector<8x128xf32>
    %84 = arith.divf %82, %83 : vector<8x128xf32>
    %85 = arith.mulf %76, %47 : vector<8x128xf32>
    %86 = arith.mulf %70, %78 : vector<8x128xf32>
    %87 = arith.addf %85, %86 : vector<8x128xf32>
    %88 = math.tanh %87 : vector<8x128xf32>
    %89 = arith.mulf %84, %88 : vector<8x128xf32>
    %90 = arith.truncf %89 : vector<8x128xf32> to vector<8x128xbf16>
    %c2_i32 = arith.constant 2 : i32
    %91 = arith.index_cast %c2_i32 : i32 to index
    %c0_30 = arith.constant 0 : index
    %c0_31 = arith.constant 0 : index
    %92 = vector.load %arg1[%91, %c0_30, %c0_31] : memref<8x8x1xf32, #tpu.memory_space<vmem>>, vector<1x8x1xf32>
    %93 = vector.shape_cast %92 : vector<1x8x1xf32> to vector<8x1xf32>
    %94 = vector.broadcast %93 : vector<8x1xf32> to vector<8x512xf32>
    %95 = arith.mulf %94, %5 : vector<8x512xf32>
    %96 = arith.addf %95, %8 : vector<8x512xf32>
    %c0_32 = arith.constant 0 : index
    %c0_33 = arith.constant 0 : index
    %97 = vector.load %arg4[%c0_32, %c0_33] : memref<128x256xbf16, #tpu.memory_space<vmem>>, vector<128x256xbf16>
    %cst_34 = arith.constant dense<0.000000e+00> : vector<8x256xf32>
    %98 = tpu.matmul %90, %97, %cst_34 {dimension_numbers = #tpu.dot_dimension_numbers<[1], [0], [0], [1], [0, 0, 1, 1], [], []>} : vector<8x128xbf16>, vector<128x256xbf16>, vector<8x256xf32> -> vector<8x256xf32>
    %c0_35 = arith.constant 0 : index
    %c0_36 = arith.constant 0 : index
    %99 = vector.load %arg5[%c0_35, %c0_36] : memref<128x256xbf16, #tpu.memory_space<vmem>>, vector<128x256xbf16>
    %cst_37 = arith.constant dense<0.000000e+00> : vector<8x256xf32>
    %100 = tpu.matmul %90, %99, %cst_37 {dimension_numbers = #tpu.dot_dimension_numbers<[1], [0], [0], [1], [0, 0, 1, 1], [], []>} : vector<8x128xbf16>, vector<128x256xbf16>, vector<8x256xf32> -> vector<8x256xf32>
    %101 = vector.extract_strided_slice %96 {offsets = [0, 0], sizes = [8, 256], strides = [1, 1]} : vector<8x512xf32> to vector<8x256xf32>
    %102 = arith.addf %101, %98 : vector<8x256xf32>
    %103 = vector.extract_strided_slice %96 {offsets = [0, 256], sizes = [8, 256], strides = [1, 1]} : vector<8x512xf32> to vector<8x256xf32>
    %104 = arith.addf %103, %100 : vector<8x256xf32>
    %105 = vector.extract_strided_slice %102 {offsets = [0, 0], sizes = [8, 128], strides = [1, 1]} : vector<8x256xf32> to vector<8x128xf32>
    %106 = arith.negf %105 : vector<8x128xf32>
    %107 = math.exp %106 : vector<8x128xf32>
    %cst_38 = arith.constant 1.000000e+00 : f32
    %108 = vector.broadcast %cst_38 : f32 to vector<8x128xf32>
    %109 = arith.addf %108, %107 : vector<8x128xf32>
    %110 = arith.divf %108, %109 : vector<8x128xf32>
    %111 = vector.extract_strided_slice %102 {offsets = [0, 128], sizes = [8, 128], strides = [1, 1]} : vector<8x256xf32> to vector<8x128xf32>
    %112 = arith.negf %111 : vector<8x128xf32>
    %113 = math.exp %112 : vector<8x128xf32>
    %cst_39 = arith.constant 1.000000e+00 : f32
    %114 = vector.broadcast %cst_39 : f32 to vector<8x128xf32>
    %115 = arith.addf %114, %113 : vector<8x128xf32>
    %116 = arith.divf %114, %115 : vector<8x128xf32>
    %117 = vector.extract_strided_slice %104 {offsets = [0, 0], sizes = [8, 128], strides = [1, 1]} : vector<8x256xf32> to vector<8x128xf32>
    %118 = math.tanh %117 : vector<8x128xf32>
    %119 = vector.extract_strided_slice %104 {offsets = [0, 128], sizes = [8, 128], strides = [1, 1]} : vector<8x256xf32> to vector<8x128xf32>
    %120 = arith.negf %119 : vector<8x128xf32>
    %121 = math.exp %120 : vector<8x128xf32>
    %cst_40 = arith.constant 1.000000e+00 : f32
    %122 = vector.broadcast %cst_40 : f32 to vector<8x128xf32>
    %123 = arith.addf %122, %121 : vector<8x128xf32>
    %124 = arith.divf %122, %123 : vector<8x128xf32>
    %125 = arith.mulf %116, %87 : vector<8x128xf32>
    %126 = arith.mulf %110, %118 : vector<8x128xf32>
    %127 = arith.addf %125, %126 : vector<8x128xf32>
    %128 = math.tanh %127 : vector<8x128xf32>
    %129 = arith.mulf %124, %128 : vector<8x128xf32>
    %130 = arith.truncf %129 : vector<8x128xf32> to vector<8x128xbf16>
    %c3_i32 = arith.constant 3 : i32
    %131 = arith.index_cast %c3_i32 : i32 to index
    %c0_41 = arith.constant 0 : index
    %c0_42 = arith.constant 0 : index
    %132 = vector.load %arg1[%131, %c0_41, %c0_42] : memref<8x8x1xf32, #tpu.memory_space<vmem>>, vector<1x8x1xf32>
    %133 = vector.shape_cast %132 : vector<1x8x1xf32> to vector<8x1xf32>
    %134 = vector.broadcast %133 : vector<8x1xf32> to vector<8x512xf32>
    %135 = arith.mulf %134, %5 : vector<8x512xf32>
    %136 = arith.addf %135, %8 : vector<8x512xf32>
    %c0_43 = arith.constant 0 : index
    %c0_44 = arith.constant 0 : index
    %137 = vector.load %arg4[%c0_43, %c0_44] : memref<128x256xbf16, #tpu.memory_space<vmem>>, vector<128x256xbf16>
    %cst_45 = arith.constant dense<0.000000e+00> : vector<8x256xf32>
    %138 = tpu.matmul %130, %137, %cst_45 {dimension_numbers = #tpu.dot_dimension_numbers<[1], [0], [0], [1], [0, 0, 1, 1], [], []>} : vector<8x128xbf16>, vector<128x256xbf16>, vector<8x256xf32> -> vector<8x256xf32>
    %c0_46 = arith.constant 0 : index
    %c0_47 = arith.constant 0 : index
    %139 = vector.load %arg5[%c0_46, %c0_47] : memref<128x256xbf16, #tpu.memory_space<vmem>>, vector<128x256xbf16>
    %cst_48 = arith.constant dense<0.000000e+00> : vector<8x256xf32>
    %140 = tpu.matmul %130, %139, %cst_48 {dimension_numbers = #tpu.dot_dimension_numbers<[1], [0], [0], [1], [0, 0, 1, 1], [], []>} : vector<8x128xbf16>, vector<128x256xbf16>, vector<8x256xf32> -> vector<8x256xf32>
    %141 = vector.extract_strided_slice %136 {offsets = [0, 0], sizes = [8, 256], strides = [1, 1]} : vector<8x512xf32> to vector<8x256xf32>
    %142 = arith.addf %141, %138 : vector<8x256xf32>
    %143 = vector.extract_strided_slice %136 {offsets = [0, 256], sizes = [8, 256], strides = [1, 1]} : vector<8x512xf32> to vector<8x256xf32>
    %144 = arith.addf %143, %140 : vector<8x256xf32>
    %145 = vector.extract_strided_slice %142 {offsets = [0, 0], sizes = [8, 128], strides = [1, 1]} : vector<8x256xf32> to vector<8x128xf32>
    %146 = arith.negf %145 : vector<8x128xf32>
    %147 = math.exp %146 : vector<8x128xf32>
    %cst_49 = arith.constant 1.000000e+00 : f32
    %148 = vector.broadcast %cst_49 : f32 to vector<8x128xf32>
    %149 = arith.addf %148, %147 : vector<8x128xf32>
    %150 = arith.divf %148, %149 : vector<8x128xf32>
    %151 = vector.extract_strided_slice %142 {offsets = [0, 128], sizes = [8, 128], strides = [1, 1]} : vector<8x256xf32> to vector<8x128xf32>
    %152 = arith.negf %151 : vector<8x128xf32>
    %153 = math.exp %152 : vector<8x128xf32>
    %cst_50 = arith.constant 1.000000e+00 : f32
    %154 = vector.broadcast %cst_50 : f32 to vector<8x128xf32>
    %155 = arith.addf %154, %153 : vector<8x128xf32>
    %156 = arith.divf %154, %155 : vector<8x128xf32>
    %157 = vector.extract_strided_slice %144 {offsets = [0, 0], sizes = [8, 128], strides = [1, 1]} : vector<8x256xf32> to vector<8x128xf32>
    %158 = math.tanh %157 : vector<8x128xf32>
    %159 = vector.extract_strided_slice %144 {offsets = [0, 128], sizes = [8, 128], strides = [1, 1]} : vector<8x256xf32> to vector<8x128xf32>
    %160 = arith.negf %159 : vector<8x128xf32>
    %161 = math.exp %160 : vector<8x128xf32>
    %cst_51 = arith.constant 1.000000e+00 : f32
    %162 = vector.broadcast %cst_51 : f32 to vector<8x128xf32>
    %163 = arith.addf %162, %161 : vector<8x128xf32>
    %164 = arith.divf %162, %163 : vector<8x128xf32>
    %165 = arith.mulf %156, %127 : vector<8x128xf32>
    %166 = arith.mulf %150, %158 : vector<8x128xf32>
    %167 = arith.addf %165, %166 : vector<8x128xf32>
    %168 = math.tanh %167 : vector<8x128xf32>
    %169 = arith.mulf %164, %168 : vector<8x128xf32>
    %170 = arith.truncf %169 : vector<8x128xf32> to vector<8x128xbf16>
    %c4_i32 = arith.constant 4 : i32
    %171 = arith.index_cast %c4_i32 : i32 to index
    %c0_52 = arith.constant 0 : index
    %c0_53 = arith.constant 0 : index
    %172 = vector.load %arg1[%171, %c0_52, %c0_53] : memref<8x8x1xf32, #tpu.memory_space<vmem>>, vector<1x8x1xf32>
    %173 = vector.shape_cast %172 : vector<1x8x1xf32> to vector<8x1xf32>
    %174 = vector.broadcast %173 : vector<8x1xf32> to vector<8x512xf32>
    %175 = arith.mulf %174, %5 : vector<8x512xf32>
    %176 = arith.addf %175, %8 : vector<8x512xf32>
    %c0_54 = arith.constant 0 : index
    %c0_55 = arith.constant 0 : index
    %177 = vector.load %arg4[%c0_54, %c0_55] : memref<128x256xbf16, #tpu.memory_space<vmem>>, vector<128x256xbf16>
    %cst_56 = arith.constant dense<0.000000e+00> : vector<8x256xf32>
    %178 = tpu.matmul %170, %177, %cst_56 {dimension_numbers = #tpu.dot_dimension_numbers<[1], [0], [0], [1], [0, 0, 1, 1], [], []>} : vector<8x128xbf16>, vector<128x256xbf16>, vector<8x256xf32> -> vector<8x256xf32>
    %c0_57 = arith.constant 0 : index
    %c0_58 = arith.constant 0 : index
    %179 = vector.load %arg5[%c0_57, %c0_58] : memref<128x256xbf16, #tpu.memory_space<vmem>>, vector<128x256xbf16>
    %cst_59 = arith.constant dense<0.000000e+00> : vector<8x256xf32>
    %180 = tpu.matmul %170, %179, %cst_59 {dimension_numbers = #tpu.dot_dimension_numbers<[1], [0], [0], [1], [0, 0, 1, 1], [], []>} : vector<8x128xbf16>, vector<128x256xbf16>, vector<8x256xf32> -> vector<8x256xf32>
    %181 = vector.extract_strided_slice %176 {offsets = [0, 0], sizes = [8, 256], strides = [1, 1]} : vector<8x512xf32> to vector<8x256xf32>
    %182 = arith.addf %181, %178 : vector<8x256xf32>
    %183 = vector.extract_strided_slice %176 {offsets = [0, 256], sizes = [8, 256], strides = [1, 1]} : vector<8x512xf32> to vector<8x256xf32>
    %184 = arith.addf %183, %180 : vector<8x256xf32>
    %185 = vector.extract_strided_slice %182 {offsets = [0, 0], sizes = [8, 128], strides = [1, 1]} : vector<8x256xf32> to vector<8x128xf32>
    %186 = arith.negf %185 : vector<8x128xf32>
    %187 = math.exp %186 : vector<8x128xf32>
    %cst_60 = arith.constant 1.000000e+00 : f32
    %188 = vector.broadcast %cst_60 : f32 to vector<8x128xf32>
    %189 = arith.addf %188, %187 : vector<8x128xf32>
    %190 = arith.divf %188, %189 : vector<8x128xf32>
    %191 = vector.extract_strided_slice %182 {offsets = [0, 128], sizes = [8, 128], strides = [1, 1]} : vector<8x256xf32> to vector<8x128xf32>
    %192 = arith.negf %191 : vector<8x128xf32>
    %193 = math.exp %192 : vector<8x128xf32>
    %cst_61 = arith.constant 1.000000e+00 : f32
    %194 = vector.broadcast %cst_61 : f32 to vector<8x128xf32>
    %195 = arith.addf %194, %193 : vector<8x128xf32>
    %196 = arith.divf %194, %195 : vector<8x128xf32>
    %197 = vector.extract_strided_slice %184 {offsets = [0, 0], sizes = [8, 128], strides = [1, 1]} : vector<8x256xf32> to vector<8x128xf32>
    %198 = math.tanh %197 : vector<8x128xf32>
    %199 = vector.extract_strided_slice %184 {offsets = [0, 128], sizes = [8, 128], strides = [1, 1]} : vector<8x256xf32> to vector<8x128xf32>
    %200 = arith.negf %199 : vector<8x128xf32>
    %201 = math.exp %200 : vector<8x128xf32>
    %cst_62 = arith.constant 1.000000e+00 : f32
    %202 = vector.broadcast %cst_62 : f32 to vector<8x128xf32>
    %203 = arith.addf %202, %201 : vector<8x128xf32>
    %204 = arith.divf %202, %203 : vector<8x128xf32>
    %205 = arith.mulf %196, %167 : vector<8x128xf32>
    %206 = arith.mulf %190, %198 : vector<8x128xf32>
    %207 = arith.addf %205, %206 : vector<8x128xf32>
    %208 = math.tanh %207 : vector<8x128xf32>
    %209 = arith.mulf %204, %208 : vector<8x128xf32>
    %210 = arith.truncf %209 : vector<8x128xf32> to vector<8x128xbf16>
    %c5_i32 = arith.constant 5 : i32
    %211 = arith.index_cast %c5_i32 : i32 to index
    %c0_63 = arith.constant 0 : index
    %c0_64 = arith.constant 0 : index
    %212 = vector.load %arg1[%211, %c0_63, %c0_64] : memref<8x8x1xf32, #tpu.memory_space<vmem>>, vector<1x8x1xf32>
    %213 = vector.shape_cast %212 : vector<1x8x1xf32> to vector<8x1xf32>
    %214 = vector.broadcast %213 : vector<8x1xf32> to vector<8x512xf32>
    %215 = arith.mulf %214, %5 : vector<8x512xf32>
    %216 = arith.addf %215, %8 : vector<8x512xf32>
    %c0_65 = arith.constant 0 : index
    %c0_66 = arith.constant 0 : index
    %217 = vector.load %arg4[%c0_65, %c0_66] : memref<128x256xbf16, #tpu.memory_space<vmem>>, vector<128x256xbf16>
    %cst_67 = arith.constant dense<0.000000e+00> : vector<8x256xf32>
    %218 = tpu.matmul %210, %217, %cst_67 {dimension_numbers = #tpu.dot_dimension_numbers<[1], [0], [0], [1], [0, 0, 1, 1], [], []>} : vector<8x128xbf16>, vector<128x256xbf16>, vector<8x256xf32> -> vector<8x256xf32>
    %c0_68 = arith.constant 0 : index
    %c0_69 = arith.constant 0 : index
    %219 = vector.load %arg5[%c0_68, %c0_69] : memref<128x256xbf16, #tpu.memory_space<vmem>>, vector<128x256xbf16>
    %cst_70 = arith.constant dense<0.000000e+00> : vector<8x256xf32>
    %220 = tpu.matmul %210, %219, %cst_70 {dimension_numbers = #tpu.dot_dimension_numbers<[1], [0], [0], [1], [0, 0, 1, 1], [], []>} : vector<8x128xbf16>, vector<128x256xbf16>, vector<8x256xf32> -> vector<8x256xf32>
    %221 = vector.extract_strided_slice %216 {offsets = [0, 0], sizes = [8, 256], strides = [1, 1]} : vector<8x512xf32> to vector<8x256xf32>
    %222 = arith.addf %221, %218 : vector<8x256xf32>
    %223 = vector.extract_strided_slice %216 {offsets = [0, 256], sizes = [8, 256], strides = [1, 1]} : vector<8x512xf32> to vector<8x256xf32>
    %224 = arith.addf %223, %220 : vector<8x256xf32>
    %225 = vector.extract_strided_slice %222 {offsets = [0, 0], sizes = [8, 128], strides = [1, 1]} : vector<8x256xf32> to vector<8x128xf32>
    %226 = arith.negf %225 : vector<8x128xf32>
    %227 = math.exp %226 : vector<8x128xf32>
    %cst_71 = arith.constant 1.000000e+00 : f32
    %228 = vector.broadcast %cst_71 : f32 to vector<8x128xf32>
    %229 = arith.addf %228, %227 : vector<8x128xf32>
    %230 = arith.divf %228, %229 : vector<8x128xf32>
    %231 = vector.extract_strided_slice %222 {offsets = [0, 128], sizes = [8, 128], strides = [1, 1]} : vector<8x256xf32> to vector<8x128xf32>
    %232 = arith.negf %231 : vector<8x128xf32>
    %233 = math.exp %232 : vector<8x128xf32>
    %cst_72 = arith.constant 1.000000e+00 : f32
    %234 = vector.broadcast %cst_72 : f32 to vector<8x128xf32>
    %235 = arith.addf %234, %233 : vector<8x128xf32>
    %236 = arith.divf %234, %235 : vector<8x128xf32>
    %237 = vector.extract_strided_slice %224 {offsets = [0, 0], sizes = [8, 128], strides = [1, 1]} : vector<8x256xf32> to vector<8x128xf32>
    %238 = math.tanh %237 : vector<8x128xf32>
    %239 = vector.extract_strided_slice %224 {offsets = [0, 128], sizes = [8, 128], strides = [1, 1]} : vector<8x256xf32> to vector<8x128xf32>
    %240 = arith.negf %239 : vector<8x128xf32>
    %241 = math.exp %240 : vector<8x128xf32>
    %cst_73 = arith.constant 1.000000e+00 : f32
    %242 = vector.broadcast %cst_73 : f32 to vector<8x128xf32>
    %243 = arith.addf %242, %241 : vector<8x128xf32>
    %244 = arith.divf %242, %243 : vector<8x128xf32>
    %245 = arith.mulf %236, %207 : vector<8x128xf32>
    %246 = arith.mulf %230, %238 : vector<8x128xf32>
    %247 = arith.addf %245, %246 : vector<8x128xf32>
    %248 = math.tanh %247 : vector<8x128xf32>
    %249 = arith.mulf %244, %248 : vector<8x128xf32>
    %250 = arith.truncf %249 : vector<8x128xf32> to vector<8x128xbf16>
    %c6_i32 = arith.constant 6 : i32
    %251 = arith.index_cast %c6_i32 : i32 to index
    %c0_74 = arith.constant 0 : index
    %c0_75 = arith.constant 0 : index
    %252 = vector.load %arg1[%251, %c0_74, %c0_75] : memref<8x8x1xf32, #tpu.memory_space<vmem>>, vector<1x8x1xf32>
    %253 = vector.shape_cast %252 : vector<1x8x1xf32> to vector<8x1xf32>
    %254 = vector.broadcast %253 : vector<8x1xf32> to vector<8x512xf32>
    %255 = arith.mulf %254, %5 : vector<8x512xf32>
    %256 = arith.addf %255, %8 : vector<8x512xf32>
    %c0_76 = arith.constant 0 : index
    %c0_77 = arith.constant 0 : index
    %257 = vector.load %arg4[%c0_76, %c0_77] : memref<128x256xbf16, #tpu.memory_space<vmem>>, vector<128x256xbf16>
    %cst_78 = arith.constant dense<0.000000e+00> : vector<8x256xf32>
    %258 = tpu.matmul %250, %257, %cst_78 {dimension_numbers = #tpu.dot_dimension_numbers<[1], [0], [0], [1], [0, 0, 1, 1], [], []>} : vector<8x128xbf16>, vector<128x256xbf16>, vector<8x256xf32> -> vector<8x256xf32>
    %c0_79 = arith.constant 0 : index
    %c0_80 = arith.constant 0 : index
    %259 = vector.load %arg5[%c0_79, %c0_80] : memref<128x256xbf16, #tpu.memory_space<vmem>>, vector<128x256xbf16>
    %cst_81 = arith.constant dense<0.000000e+00> : vector<8x256xf32>
    %260 = tpu.matmul %250, %259, %cst_81 {dimension_numbers = #tpu.dot_dimension_numbers<[1], [0], [0], [1], [0, 0, 1, 1], [], []>} : vector<8x128xbf16>, vector<128x256xbf16>, vector<8x256xf32> -> vector<8x256xf32>
    %261 = vector.extract_strided_slice %256 {offsets = [0, 0], sizes = [8, 256], strides = [1, 1]} : vector<8x512xf32> to vector<8x256xf32>
    %262 = arith.addf %261, %258 : vector<8x256xf32>
    %263 = vector.extract_strided_slice %256 {offsets = [0, 256], sizes = [8, 256], strides = [1, 1]} : vector<8x512xf32> to vector<8x256xf32>
    %264 = arith.addf %263, %260 : vector<8x256xf32>
    %265 = vector.extract_strided_slice %262 {offsets = [0, 0], sizes = [8, 128], strides = [1, 1]} : vector<8x256xf32> to vector<8x128xf32>
    %266 = arith.negf %265 : vector<8x128xf32>
    %267 = math.exp %266 : vector<8x128xf32>
    %cst_82 = arith.constant 1.000000e+00 : f32
    %268 = vector.broadcast %cst_82 : f32 to vector<8x128xf32>
    %269 = arith.addf %268, %267 : vector<8x128xf32>
    %270 = arith.divf %268, %269 : vector<8x128xf32>
    %271 = vector.extract_strided_slice %262 {offsets = [0, 128], sizes = [8, 128], strides = [1, 1]} : vector<8x256xf32> to vector<8x128xf32>
    %272 = arith.negf %271 : vector<8x128xf32>
    %273 = math.exp %272 : vector<8x128xf32>
    %cst_83 = arith.constant 1.000000e+00 : f32
    %274 = vector.broadcast %cst_83 : f32 to vector<8x128xf32>
    %275 = arith.addf %274, %273 : vector<8x128xf32>
    %276 = arith.divf %274, %275 : vector<8x128xf32>
    %277 = vector.extract_strided_slice %264 {offsets = [0, 0], sizes = [8, 128], strides = [1, 1]} : vector<8x256xf32> to vector<8x128xf32>
    %278 = math.tanh %277 : vector<8x128xf32>
    %279 = vector.extract_strided_slice %264 {offsets = [0, 128], sizes = [8, 128], strides = [1, 1]} : vector<8x256xf32> to vector<8x128xf32>
    %280 = arith.negf %279 : vector<8x128xf32>
    %281 = math.exp %280 : vector<8x128xf32>
    %cst_84 = arith.constant 1.000000e+00 : f32
    %282 = vector.broadcast %cst_84 : f32 to vector<8x128xf32>
    %283 = arith.addf %282, %281 : vector<8x128xf32>
    %284 = arith.divf %282, %283 : vector<8x128xf32>
    %285 = arith.mulf %276, %247 : vector<8x128xf32>
    %286 = arith.mulf %270, %278 : vector<8x128xf32>
    %287 = arith.addf %285, %286 : vector<8x128xf32>
    %288 = math.tanh %287 : vector<8x128xf32>
    %289 = arith.mulf %284, %288 : vector<8x128xf32>
    %290 = arith.truncf %289 : vector<8x128xf32> to vector<8x128xbf16>
    %c7_i32 = arith.constant 7 : i32
    %291 = arith.index_cast %c7_i32 : i32 to index
    %c0_85 = arith.constant 0 : index
    %c0_86 = arith.constant 0 : index
    %292 = vector.load %arg1[%291, %c0_85, %c0_86] : memref<8x8x1xf32, #tpu.memory_space<vmem>>, vector<1x8x1xf32>
    %293 = vector.shape_cast %292 : vector<1x8x1xf32> to vector<8x1xf32>
    %294 = vector.broadcast %293 : vector<8x1xf32> to vector<8x512xf32>
    %295 = arith.mulf %294, %5 : vector<8x512xf32>
    %296 = arith.addf %295, %8 : vector<8x512xf32>
    %c0_87 = arith.constant 0 : index
    %c0_88 = arith.constant 0 : index
    %297 = vector.load %arg4[%c0_87, %c0_88] : memref<128x256xbf16, #tpu.memory_space<vmem>>, vector<128x256xbf16>
    %cst_89 = arith.constant dense<0.000000e+00> : vector<8x256xf32>
    %298 = tpu.matmul %290, %297, %cst_89 {dimension_numbers = #tpu.dot_dimension_numbers<[1], [0], [0], [1], [0, 0, 1, 1], [], []>} : vector<8x128xbf16>, vector<128x256xbf16>, vector<8x256xf32> -> vector<8x256xf32>
    %c0_90 = arith.constant 0 : index
    %c0_91 = arith.constant 0 : index
    %299 = vector.load %arg5[%c0_90, %c0_91] : memref<128x256xbf16, #tpu.memory_space<vmem>>, vector<128x256xbf16>
    %cst_92 = arith.constant dense<0.000000e+00> : vector<8x256xf32>
    %300 = tpu.matmul %290, %299, %cst_92 {dimension_numbers = #tpu.dot_dimension_numbers<[1], [0], [0], [1], [0, 0, 1, 1], [], []>} : vector<8x128xbf16>, vector<128x256xbf16>, vector<8x256xf32> -> vector<8x256xf32>
    %301 = vector.extract_strided_slice %296 {offsets = [0, 0], sizes = [8, 256], strides = [1, 1]} : vector<8x512xf32> to vector<8x256xf32>
    %302 = arith.addf %301, %298 : vector<8x256xf32>
    %303 = vector.extract_strided_slice %296 {offsets = [0, 256], sizes = [8, 256], strides = [1, 1]} : vector<8x512xf32> to vector<8x256xf32>
    %304 = arith.addf %303, %300 : vector<8x256xf32>
    %305 = vector.extract_strided_slice %302 {offsets = [0, 0], sizes = [8, 128], strides = [1, 1]} : vector<8x256xf32> to vector<8x128xf32>
    %306 = arith.negf %305 : vector<8x128xf32>
    %307 = math.exp %306 : vector<8x128xf32>
    %cst_93 = arith.constant 1.000000e+00 : f32
    %308 = vector.broadcast %cst_93 : f32 to vector<8x128xf32>
    %309 = arith.addf %308, %307 : vector<8x128xf32>
    %310 = arith.divf %308, %309 : vector<8x128xf32>
    %311 = vector.extract_strided_slice %302 {offsets = [0, 128], sizes = [8, 128], strides = [1, 1]} : vector<8x256xf32> to vector<8x128xf32>
    %312 = arith.negf %311 : vector<8x128xf32>
    %313 = math.exp %312 : vector<8x128xf32>
    %cst_94 = arith.constant 1.000000e+00 : f32
    %314 = vector.broadcast %cst_94 : f32 to vector<8x128xf32>
    %315 = arith.addf %314, %313 : vector<8x128xf32>
    %316 = arith.divf %314, %315 : vector<8x128xf32>
    %317 = vector.extract_strided_slice %304 {offsets = [0, 0], sizes = [8, 128], strides = [1, 1]} : vector<8x256xf32> to vector<8x128xf32>
    %318 = math.tanh %317 : vector<8x128xf32>
    %319 = vector.extract_strided_slice %304 {offsets = [0, 128], sizes = [8, 128], strides = [1, 1]} : vector<8x256xf32> to vector<8x128xf32>
    %320 = arith.negf %319 : vector<8x128xf32>
    %321 = math.exp %320 : vector<8x128xf32>
    %cst_95 = arith.constant 1.000000e+00 : f32
    %322 = vector.broadcast %cst_95 : f32 to vector<8x128xf32>
    %323 = arith.addf %322, %321 : vector<8x128xf32>
    %324 = arith.divf %322, %323 : vector<8x128xf32>
    %325 = arith.mulf %316, %287 : vector<8x128xf32>
    %326 = arith.mulf %310, %318 : vector<8x128xf32>
    %327 = arith.addf %325, %326 : vector<8x128xf32>
    %328 = math.tanh %327 : vector<8x128xf32>
    %329 = arith.mulf %324, %328 : vector<8x128xf32>
    %330 = arith.truncf %329 : vector<8x128xf32> to vector<8x128xbf16>
    %c8_i32 = arith.constant 8 : i32
    %c0_96 = arith.constant 0 : index
    %c0_97 = arith.constant 0 : index
    %331 = vector.load %arg9[%c0_96, %c0_97] : memref<8x128xbf16, #tpu.memory_space<vmem>>, vector<8x128xbf16>
    tpu.vector_store %arg9[%c0_96, %c0_97], %330 {strides = array<i32>} : memref<8x128xbf16, #tpu.memory_space<vmem>>, vector<8x128xbf16>,
    %c0_98 = arith.constant 0 : index
    %c0_99 = arith.constant 0 : index
    %332 = vector.load %arg10[%c0_98, %c0_99] : memref<8x128xf32, #tpu.memory_space<vmem>>, vector<8x128xf32>
    tpu.vector_store %arg10[%c0_98, %c0_99], %327 {strides = array<i32>} : memref<8x128xf32, #tpu.memory_space<vmem>>, vector<8x128xf32>,
    %c0_i32_100 = arith.constant 0 : i32
    %333 = arith.cmpi eq, %arg0, %c0_i32_100 : i32
    %334 = arith.extui %333 : i1 to i32
    %c0_i32_101 = arith.constant 0 : i32
    %335 = arith.cmpi ne, %334, %c0_i32_101 : i32
    scf.if %335 {
      %336 = arith.extf %330 : vector<8x128xbf16> to vector<8x128xf32>
      %337 = math.tanh %336 : vector<8x128xf32>
      %c0_102 = arith.constant 0 : index
      %c0_103 = arith.constant 0 : index
      %338 = vector.load %arg6[%c0_102, %c0_103] : memref<128x128xf32, #tpu.memory_space<vmem>>, vector<128x128xf32>
      %cst_104 = arith.constant dense<0.000000e+00> : vector<8x128xf32>
      %339 = tpu.matmul %337, %338, %cst_104 {dimension_numbers = #tpu.dot_dimension_numbers<[1], [0], [0], [1], [0, 0, 1, 1], [], []>} : vector<8x128xf32>, vector<128x128xf32>, vector<8x128xf32> -> vector<8x128xf32>
      %c0_105 = arith.constant 0 : index
      %c0_106 = arith.constant 0 : index
      %340 = vector.load %arg7[%c0_105, %c0_106] : memref<1x128xf32, #tpu.memory_space<vmem>>, vector<1x128xf32>
      %341 = vector.broadcast %340 : vector<1x128xf32> to vector<8x128xf32>
      %342 = arith.addf %339, %341 : vector<8x128xf32>
      %c0_107 = arith.constant 0 : index
      %c0_108 = arith.constant 0 : index
      %343 = vector.load %arg8[%c0_107, %c0_108] : memref<8x128xf32, #tpu.memory_space<vmem>>, vector<8x128xf32>
      tpu.vector_store %arg8[%c0_107, %c0_108], %342 {strides = array<i32>} : memref<8x128xf32, #tpu.memory_space<vmem>>, vector<8x128xf32>,
    } else {
    }
    return
  }
  func.func @transform_0(%arg0: i32) -> (i32, i32, i32) {
    %c0_i32 = arith.constant 0 : i32
    %c0_i32_0 = arith.constant 0 : i32
    %c0_i32_1 = arith.constant 0 : i32
    return %arg0, %c0_i32, %c0_i32_0 : i32, i32, i32
  }
  func.func @transform_1(%arg0: i32) -> (i32, i32) {
    %c0_i32 = arith.constant 0 : i32
    %c0_i32_0 = arith.constant 0 : i32
    %c0_i32_1 = arith.constant 0 : i32
    return %c0_i32, %c0_i32_0 : i32, i32
  }
  func.func @transform_2(%arg0: i32) -> (i32, i32) {
    %c0_i32 = arith.constant 0 : i32
    %c0_i32_0 = arith.constant 0 : i32
    %c0_i32_1 = arith.constant 0 : i32
    return %c0_i32, %c0_i32_0 : i32, i32
  }
  func.func @transform_3(%arg0: i32) -> (i32, i32) {
    %c0_i32 = arith.constant 0 : i32
    %c0_i32_0 = arith.constant 0 : i32
    %c0_i32_1 = arith.constant 0 : i32
    return %c0_i32, %c0_i32_0 : i32, i32
  }
  func.func @transform_4(%arg0: i32) -> (i32, i32) {
    %c0_i32 = arith.constant 0 : i32
    %c0_i32_0 = arith.constant 0 : i32
    %c0_i32_1 = arith.constant 0 : i32
    return %c0_i32, %c0_i32_0 : i32, i32
  }
  func.func @transform_5(%arg0: i32) -> (i32, i32) {
    %c0_i32 = arith.constant 0 : i32
    %c0_i32_0 = arith.constant 0 : i32
    %c0_i32_1 = arith.constant 0 : i32
    return %c0_i32, %c0_i32_0 : i32, i32
  }
  func.func @transform_6(%arg0: i32) -> (i32, i32) {
    %c0_i32 = arith.constant 0 : i32
    %c0_i32_0 = arith.constant 0 : i32
    %c0_i32_1 = arith.constant 0 : i32
    return %c0_i32, %c0_i32_0 : i32, i32
  }
  func.func @transform_7(%arg0: i32) -> (i32, i32) {
    %c0_i32 = arith.constant 0 : i32
    %c0_i32_0 = arith.constant 0 : i32
    %c0_i32_1 = arith.constant 0 : i32
    return %c0_i32, %c0_i32_0 : i32, i32
  }
}

</mosaic_0001>

<llo_original>
// kernel: lstm_net_forward.1
$region0: #{lstm_net_forward.1}
  #allocation0 [shape = 'u32[]', space=smem, size = 0x4, offset = 0x4, fixed_abs, tag = 'smem constant byte address 0x4 - core index']
  #allocation1 [shape = 'u32[144,128]{1,0:T(1,128)}', space=vmem, size = 0x12000, scoped, tag = 'internal scratch']
  #allocation2 [shape = 'bf16[8,128]{1,0:T(8,128)(2,1)}', space=vmem, size = 0x800, scoped, tag = 'scratch operand']
  #allocation3 [shape = 'f32[8,128]{1,0:T(8,128)}', space=vmem, size = 0x1000, scoped, tag = 'scratch operand']
  %s0 = inlined_call_operand.vmem [shape: f32[8,8,1], index: 0, kind: input, shape index: {}]
  %s1 = inlined_call_operand.vmem [shape: f32[1,512], index: 1, kind: input, shape index: {}]
  %s2 = inlined_call_operand.vmem [shape: f32[1,512], index: 2, kind: input, shape index: {}]
  %s3 = inlined_call_operand.vmem [shape: bf16[128,256], index: 3, kind: input, shape index: {}]
  %s4 = inlined_call_operand.vmem [shape: bf16[128,256], index: 4, kind: input, shape index: {}]
  %s5 = inlined_call_operand.vmem [shape: f32[128,128], index: 5, kind: input, shape index: {}]
  %s6 = inlined_call_operand.vmem [shape: f32[1,128], index: 6, kind: input, shape index: {}]
  %s7 = inlined_call_operand.vmem [shape: f32[8,128], index: 7, kind: output, shape index: {}]
  %s8 = sld [smem:[#allocation0]]
  $region46: #{lstm_net_forward.1} parent=0
    _
  %s10 = ssub.s32 1, %s8
  %s11 = scalar_select 0, %s10, %s8
  // Predicated region
  $region2: #{lstm_net_forward.1} parent=0 // pred_check
    _
  $region3: #{lstm_net_forward.1} parent=0 // pred_check_branch
    %13 = sbr.rel (0) target = $region5
  $region4: #{lstm_net_forward.1} parent=0 // pred_region
    _
  $region5: #{lstm_net_forward.1} parent=0 // pred_fallthru
    _
  // Predicated region
  $region6: #{lstm_net_forward.1} parent=0 // pred_check
    _
  $region7: #{lstm_net_forward.1} parent=0 // pred_check_branch
    %15 = sbr.rel (0) target = $region9
  $region8: #{lstm_net_forward.1} parent=0 // pred_region
    _
  $region9: #{lstm_net_forward.1} parent=0 // pred_fallthru
    _
  // Predicated region
  $region10: #{lstm_net_forward.1} parent=0 // pred_check
    _
  $region11: #{lstm_net_forward.1} parent=0 // pred_check_branch
    %17 = sbr.rel (0) target = $region13
  $region12: #{lstm_net_forward.1} parent=0 // pred_region
    _
  $region13: #{lstm_net_forward.1} parent=0 // pred_fallthru
    _
  // Predicated region
  $region14: #{lstm_net_forward.1} parent=0 // pred_check
    _
  $region15: #{lstm_net_forward.1} parent=0 // pred_check_branch
    %19 = sbr.rel (0) target = $region17
  $region16: #{lstm_net_forward.1} parent=0 // pred_region
    _
  $region17: #{lstm_net_forward.1} parent=0 // pred_fallthru
    _
  // Predicated region
  $region18: #{lstm_net_forward.1} parent=0 // pred_check
    _
  $region19: #{lstm_net_forward.1} parent=0 // pred_check_branch
    %21 = sbr.rel (0) target = $region21
  $region20: #{lstm_net_forward.1} parent=0 // pred_region
    _
  $region21: #{lstm_net_forward.1} parent=0 // pred_fallthru
    _
  // Predicated region
  $region22: #{lstm_net_forward.1} parent=0 // pred_check
    _
  $region23: #{lstm_net_forward.1} parent=0 // pred_check_branch
    %23 = sbr.rel (0) target = $region25
  $region24: #{lstm_net_forward.1} parent=0 // pred_region
    _
  $region25: #{lstm_net_forward.1} parent=0 // pred_fallthru
    _
  // Predicated region
  $region26: #{lstm_net_forward.1} parent=0 // pred_check
    _
  $region27: #{lstm_net_forward.1} parent=0 // pred_check_branch
    %25 = sbr.rel (0) target = $region29
  $region28: #{lstm_net_forward.1} parent=0 // pred_region
    _
  $region29: #{lstm_net_forward.1} parent=0 // pred_fallthru
    _
  %p27 = scmp.eq.s32.totalorder 0, 0
  // Predicated region
  $region30: #{lstm_net_forward.1} parent=0 // pred_check
    %p28 = pneg %p27
  $region31: #{lstm_net_forward.1} parent=0 // pred_check_branch
    %30 = sbr.rel (%p28) target = $region33
  $region32: #{lstm_net_forward.1} parent=0 // pred_region
    %31 = vst [vmem:[#allocation2] sm:$0xf] 0
    %32 = vst [vmem:[#allocation3] sm:$0xff] 0.0
  $region33: #{lstm_net_forward.1} parent=0 // pred_fallthru
    _
  %v33 = vld [vmem:[%s1] sm:$0xf]
  %v35 = vlaneseq
  %v36 = vshrl.u32 %v35, 7
  %v37 = vsub.s32 0, %v36
  %v38 = vrot.slane %v33, %v37
  %v39 = vlaneseq
  %v40 = vshrl.u32 %v39, 7
  %v41 = vsub.s32 1, %v40
  %v42 = vrot.slane %v33, %v41
  %v43 = vlaneseq
  %v44 = vshrl.u32 %v43, 7
  %v45 = vsub.s32 2, %v44
  %v46 = vrot.slane %v33, %v45
  %v47 = vlaneseq
  %v48 = vshrl.u32 %v47, 7
  %v49 = vsub.s32 3, %v48
  %v50 = vrot.slane %v33, %v49
  %v55 = vld [vmem:[%s2] sm:$0xf]
  %v57 = vlaneseq
  %v58 = vshrl.u32 %v57, 7
  %v59 = vsub.s32 0, %v58
  %v60 = vrot.slane %v55, %v59
  %v61 = vlaneseq
  %v62 = vshrl.u32 %v61, 7
  %v63 = vsub.s32 1, %v62
  %v64 = vrot.slane %v55, %v63
  %v65 = vlaneseq
  %v66 = vshrl.u32 %v65, 7
  %v67 = vsub.s32 2, %v66
  %v68 = vrot.slane %v55, %v67
  %v69 = vlaneseq
  %v70 = vshrl.u32 %v69, 7
  %v71 = vsub.s32 3, %v70
  %v72 = vrot.slane %v55, %v71
  %v77 = vld [vmem:[#allocation2] sm:$0xf]
  %v78 = vld [vmem:[#allocation3] sm:$0xff]
  %v79 = vld [vmem:[%s0] sm:$0xff]
  %81 = vset.pattern.permute.xlu0 0
  %82 = vperm.xlu0 %81, %v79
  %v83 = vpop.permute.xlu0 %82
  %v85 = vmul.f32 %v83, %v38
  %v86 = vmul.f32 %v83, %v42
  %v87 = vmul.f32 %v83, %v46
  %v88 = vmul.f32 %v83, %v50
  %v89 = vadd.f32 %v85, %v60
  %v90 = vadd.f32 %v86, %v64
  %v91 = vadd.f32 %v87, %v68
  %v92 = vadd.f32 %v88, %v72
  %v93 = vld [vmem:[%s3] sm:$0xff]
  %v94 = vld [vmem:[%s3 + $0x8] sm:$0xff]
  %v95 = vld [vmem:[%s3 + $0x10] sm:$0xff]
  %v96 = vld [vmem:[%s3 + $0x18] sm:$0xff]
  %v97 = vld [vmem:[%s3 + $0x20] sm:$0xff]
  %v98 = vld [vmem:[%s3 + $0x28] sm:$0xff]
  %v99 = vld [vmem:[%s3 + $0x30] sm:$0xff]
  %v100 = vld [vmem:[%s3 + $0x38] sm:$0xff]
  %v101 = vld [vmem:[%s3 + $0x40] sm:$0xff]
  %v102 = vld [vmem:[%s3 + $0x48] sm:$0xff]
  %v103 = vld [vmem:[%s3 + $0x50] sm:$0xff]
  %v104 = vld [vmem:[%s3 + $0x58] sm:$0xff]
  %v105 = vld [vmem:[%s3 + $0x60] sm:$0xff]
  %v106 = vld [vmem:[%s3 + $0x68] sm:$0xff]
  %v107 = vld [vmem:[%s3 + $0x70] sm:$0xff]
  %v108 = vld [vmem:[%s3 + $0x78] sm:$0xff]
  %v125 = vunpack.c.l.b16 %v93
  %v126 = vunpack.c.h.b16 %v93
  %v127 = vunpack.c.l.b16 %v94
  %v128 = vunpack.c.h.b16 %v94
  %v129 = vunpack.c.l.b16 %v95
  %v130 = vunpack.c.h.b16 %v95
  %v131 = vunpack.c.l.b16 %v96
  %v132 = vunpack.c.h.b16 %v96
  %v133 = vunpack.c.l.b16 %v97
  %v134 = vunpack.c.h.b16 %v97
  %v135 = vunpack.c.l.b16 %v98
  %v136 = vunpack.c.h.b16 %v98
  %v137 = vunpack.c.l.b16 %v99
  %v138 = vunpack.c.h.b16 %v99
  %v139 = vunpack.c.l.b16 %v100
  %v140 = vunpack.c.h.b16 %v100
  %v141 = vunpack.c.l.b16 %v101
  %v142 = vunpack.c.h.b16 %v101
  %v143 = vunpack.c.l.b16 %v102
  %v144 = vunpack.c.h.b16 %v102
  %v145 = vunpack.c.l.b16 %v103
  %v146 = vunpack.c.h.b16 %v103
  %v147 = vunpack.c.l.b16 %v104
  %v148 = vunpack.c.h.b16 %v104
  %v149 = vunpack.c.l.b16 %v105
  %v150 = vunpack.c.h.b16 %v105
  %v151 = vunpack.c.l.b16 %v106
  %v152 = vunpack.c.h.b16 %v106
  %v153 = vunpack.c.l.b16 %v107
  %v154 = vunpack.c.h.b16 %v107
  %v155 = vunpack.c.l.b16 %v108
  %v156 = vunpack.c.h.b16 %v108
  %v157 = vpack.c.b16 %v127, %v125
  %v158 = vpack.c.b16 %v128, %v126
  %v159 = vpack.c.b16 %v131, %v129
  %v160 = vpack.c.b16 %v132, %v130
  %v161 = vpack.c.b16 %v135, %v133
  %v162 = vpack.c.b16 %v136, %v134
  %v163 = vpack.c.b16 %v139, %v137
  %v164 = vpack.c.b16 %v140, %v138
  %v165 = vpack.c.b16 %v143, %v141
  %v166 = vpack.c.b16 %v144, %v142
  %v167 = vpack.c.b16 %v147, %v145
  %v168 = vpack.c.b16 %v148, %v146
  %v169 = vpack.c.b16 %v151, %v149
  %v170 = vpack.c.b16 %v152, %v150
  %v171 = vpack.c.b16 %v155, %v153
  %v172 = vpack.c.b16 %v156, %v154
  %189 = vmatprep.subr.bf16.mxu0 %v158
  %190 = vmatpush1.bf16.msra.mxu0 %v157
  %191 = vmatprep.subr.bf16.mxu0 %v160
  %192 = vmatpush1.bf16.msra.mxu0 %v159
  %193 = vmatprep.subr.bf16.mxu0 %v162
  %194 = vmatpush1.bf16.msra.mxu0 %v161
  %195 = vmatprep.subr.bf16.mxu0 %v164
  %196 = vmatpush1.bf16.msra.mxu0 %v163
  %197 = vmatprep.subr.bf16.mxu0 %v166
  %198 = vmatpush1.bf16.msra.mxu0 %v165
  %199 = vmatprep.subr.bf16.mxu0 %v168
  %200 = vmatpush1.bf16.msra.mxu0 %v167
  %201 = vmatprep.subr.bf16.mxu0 %v170
  %202 = vmatpush1.bf16.msra.mxu0 %v169
  %203 = vmatprep.subr.bf16.mxu0 %v172
  %204 = vmatpush1.bf16.msra.mxu0 %v171
  %205 = vmatprep.subr.bf16.mxu0 0
  %206 = vmatpush1.bf16.msra.mxu0 0
  %207 = vmatprep.subr.bf16.mxu0 0
  %208 = vmatpush1.bf16.msra.mxu0 0
  %209 = vmatprep.subr.bf16.mxu0 0
  %210 = vmatpush1.bf16.msra.mxu0 0
  %211 = vmatprep.subr.bf16.mxu0 0
  %212 = vmatpush1.bf16.msra.mxu0 0
  %213 = vmatprep.subr.bf16.mxu0 0
  %214 = vmatpush1.bf16.msra.mxu0 0
  %215 = vmatprep.subr.bf16.mxu0 0
  %216 = vmatpush1.bf16.msra.mxu0 0
  %217 = vmatprep.subr.bf16.mxu0 0
  %218 = vmatpush1.bf16.msra.mxu0 0
  %219 = vmatprep.subr.bf16.mxu0 0
  %220 = vmatpush1.bf16.msra.mxu0 0
  %221 = vmatprep.mubr.bf16.mxu0 0
  %222 = vmatmul.mubr.bf16.gmra.mrb[0].mxu0 %v77
  %v223 = vpop.f32.mrb[0].mxu0
  %v224 = vadd.f32 0.0, %v223
  %v225 = vpop.f32.mrb[0].mxu0
  %v226 = vadd.f32 0.0, %v225
  %v227 = vpop.f32.mrb[0].mxu0
  %v228 = vpop.f32.mrb[0].mxu0
  %229 = vdwg.mxu0
  %v230 = vld [vmem:[%s4] sm:$0xff]
  %v231 = vld [vmem:[%s4 + $0x8] sm:$0xff]
  %v232 = vld [vmem:[%s4 + $0x10] sm:$0xff]
  %v233 = vld [vmem:[%s4 + $0x18] sm:$0xff]
  %v234 = vld [vmem:[%s4 + $0x20] sm:$0xff]
  %v235 = vld [vmem:[%s4 + $0x28] sm:$0xff]
  %v236 = vld [vmem:[%s4 + $0x30] sm:$0xff]
  %v237 = vld [vmem:[%s4 + $0x38] sm:$0xff]
  %v238 = vld [vmem:[%s4 + $0x40] sm:$0xff]
  %v239 = vld [vmem:[%s4 + $0x48] sm:$0xff]
  %v240 = vld [vmem:[%s4 + $0x50] sm:$0xff]
  %v241 = vld [vmem:[%s4 + $0x58] sm:$0xff]
  %v242 = vld [vmem:[%s4 + $0x60] sm:$0xff]
  %v243 = vld [vmem:[%s4 + $0x68] sm:$0xff]
  %v244 = vld [vmem:[%s4 + $0x70] sm:$0xff]
  %v245 = vld [vmem:[%s4 + $0x78] sm:$0xff]
  %v262 = vunpack.c.l.b16 %v230
  %v263 = vunpack.c.h.b16 %v230
  %v264 = vunpack.c.l.b16 %v231
  %v265 = vunpack.c.h.b16 %v231
  %v266 = vunpack.c.l.b16 %v232
  %v267 = vunpack.c.h.b16 %v232
  %v268 = vunpack.c.l.b16 %v233
  %v269 = vunpack.c.h.b16 %v233
  %v270 = vunpack.c.l.b16 %v234
  %v271 = vunpack.c.h.b16 %v234
  %v272 = vunpack.c.l.b16 %v235
  %v273 = vunpack.c.h.b16 %v235
  %v274 = vunpack.c.l.b16 %v236
  %v275 = vunpack.c.h.b16 %v236
  %v276 = vunpack.c.l.b16 %v237
  %v277 = vunpack.c.h.b16 %v237
  %v278 = vunpack.c.l.b16 %v238
  %v279 = vunpack.c.h.b16 %v238
  %v280 = vunpack.c.l.b16 %v239
  %v281 = vunpack.c.h.b16 %v239
  %v282 = vunpack.c.l.b16 %v240
  %v283 = vunpack.c.h.b16 %v240
  %v284 = vunpack.c.l.b16 %v241
  %v285 = vunpack.c.h.b16 %v241
  %v286 = vunpack.c.l.b16 %v242
  %v287 = vunpack.c.h.b16 %v242
  %v288 = vunpack.c.l.b16 %v243
  %v289 = vunpack.c.h.b16 %v243
  %v290 = vunpack.c.l.b16 %v244
  %v291 = vunpack.c.h.b16 %v244
  %v292 = vunpack.c.l.b16 %v245
  %v293 = vunpack.c.h.b16 %v245
  %v294 = vpack.c.b16 %v264, %v262
  %v295 = vpack.c.b16 %v265, %v263
  %v296 = vpack.c.b16 %v268, %v266
  %v297 = vpack.c.b16 %v269, %v267
  %v298 = vpack.c.b16 %v272, %v270
  %v299 = vpack.c.b16 %v273, %v271
  %v300 = vpack.c.b16 %v276, %v274
  %v301 = vpack.c.b16 %v277, %v275
  %v302 = vpack.c.b16 %v280, %v278
  %v303 = vpack.c.b16 %v281, %v279
  %v304 = vpack.c.b16 %v284, %v282
  %v305 = vpack.c.b16 %v285, %v283
  %v306 = vpack.c.b16 %v288, %v286
  %v307 = vpack.c.b16 %v289, %v287
  %v308 = vpack.c.b16 %v292, %v290
  %v309 = vpack.c.b16 %v293, %v291
  %326 = vmatprep.subr.bf16.mxu0 %v295
  %327 = vmatpush1.bf16.msra.mxu0 %v294
  %328 = vmatprep.subr.bf16.mxu0 %v297
  %329 = vmatpush1.bf16.msra.mxu0 %v296
  %330 = vmatprep.subr.bf16.mxu0 %v299
  %331 = vmatpush1.bf16.msra.mxu0 %v298
  %332 = vmatprep.subr.bf16.mxu0 %v301
  %333 = vmatpush1.bf16.msra.mxu0 %v300
  %334 = vmatprep.subr.bf16.mxu0 %v303
  %335 = vmatpush1.bf16.msra.mxu0 %v302
  %336 = vmatprep.subr.bf16.mxu0 %v305
  %337 = vmatpush1.bf16.msra.mxu0 %v304
  %338 = vmatprep.subr.bf16.mxu0 %v307
  %339 = vmatpush1.bf16.msra.mxu0 %v306
  %340 = vmatprep.subr.bf16.mxu0 %v309
  %341 = vmatpush1.bf16.msra.mxu0 %v308
  %342 = vmatprep.subr.bf16.mxu0 0
  %343 = vmatpush1.bf16.msra.mxu0 0
  %344 = vmatprep.subr.bf16.mxu0 0
  %345 = vmatpush1.bf16.msra.mxu0 0
  %346 = vmatprep.subr.bf16.mxu0 0
  %347 = vmatpush1.bf16.msra.mxu0 0
  %348 = vmatprep.subr.bf16.mxu0 0
  %349 = vmatpush1.bf16.msra.mxu0 0
  %350 = vmatprep.subr.bf16.mxu0 0
  %351 = vmatpush1.bf16.msra.mxu0 0
  %352 = vmatprep.subr.bf16.mxu0 0
  %353 = vmatpush1.bf16.msra.mxu0 0
  %354 = vmatprep.subr.bf16.mxu0 0
  %355 = vmatpush1.bf16.msra.mxu0 0
  %356 = vmatprep.subr.bf16.mxu0 0
  %357 = vmatpush1.bf16.msra.mxu0 0
  %358 = vmatprep.mubr.bf16.mxu0 0
  %359 = vmatmul.mubr.bf16.gmra.mrb[0].mxu0 %v77
  %v360 = vpop.f32.mrb[0].mxu0
  %v361 = vadd.f32 0.0, %v360
  %v362 = vpop.f32.mrb[0].mxu0
  %v363 = vadd.f32 0.0, %v362
  %v364 = vpop.f32.mrb[0].mxu0
  %v365 = vpop.f32.mrb[0].mxu0
  %366 = vdwg.mxu0
  %v367 = vadd.f32 %v89, %v224
  %v368 = vadd.f32 %v90, %v226
  %v369 = vadd.f32 %v91, %v361
  %v370 = vadd.f32 %v92, %v363
  %v371 = vxor.u32 %v367, 2147483648
  %v372 = vmul.f32 %v371, 1.442695
  %v373 = vpow.pop %v372
  %v374 = vadd.f32 %v373, 1.0
  %v375 = vrcp.pop %v374
  %v376 = vmul.f32 1.0, %v375
  %v377 = vxor.u32 %v368, 2147483648
  %v378 = vmul.f32 %v377, 1.442695
  %v379 = vpow.pop %v378
  %v380 = vadd.f32 %v379, 1.0
  %v381 = vrcp.pop %v380
  %v382 = vmul.f32 1.0, %v381
  %v383 = vtanh.pop %v369
  %v384 = vxor.u32 %v370, 2147483648
  %v385 = vmul.f32 %v384, 1.442695
  %v386 = vpow.pop %v385
  %v387 = vadd.f32 %v386, 1.0
  %v388 = vrcp.pop %v387
  %v389 = vmul.f32 1.0, %v388
  %v390 = vmul.f32 %v382, %v78
  %v391 = vmul.f32 %v376, %v383
  %v392 = vadd.f32 %v390, %v391
  %v393 = vtanh.pop %v392
  %v394 = vmul.f32 %v389, %v393
  %v395 = vpack.c.bf16 %v394, %v394
  %s396 = scalar_lea.vmem %s0, 8
  %v397 = vld [vmem:[%s396] sm:$0xff]
  %399 = vset.pattern.permute.xlu0 0
  %400 = vperm.xlu0 %399, %v397
  %v401 = vpop.permute.xlu0 %400
  %v403 = vmul.f32 %v401, %v38
  %v404 = vmul.f32 %v401, %v42
  %v405 = vmul.f32 %v401, %v46
  %v406 = vmul.f32 %v401, %v50
  %v407 = vadd.f32 %v403, %v60
  %v408 = vadd.f32 %v404, %v64
  %v409 = vadd.f32 %v405, %v68
  %v410 = vadd.f32 %v406, %v72
  %411 = vmatprep.subr.bf16.mxu0 %v158
  %412 = vmatpush1.bf16.msra.mxu0 %v157
  %413 = vmatprep.subr.bf16.mxu0 %v160
  %414 = vmatpush1.bf16.msra.mxu0 %v159
  %415 = vmatprep.subr.bf16.mxu0 %v162
  %416 = vmatpush1.bf16.msra.mxu0 %v161
  %417 = vmatprep.subr.bf16.mxu0 %v164
  %418 = vmatpush1.bf16.msra.mxu0 %v163
  %419 = vmatprep.subr.bf16.mxu0 %v166
  %420 = vmatpush1.bf16.msra.mxu0 %v165
  %421 = vmatprep.subr.bf16.mxu0 %v168
  %422 = vmatpush1.bf16.msra.mxu0 %v167
  %423 = vmatprep.subr.bf16.mxu0 %v170
  %424 = vmatpush1.bf16.msra.mxu0 %v169
  %425 = vmatprep.subr.bf16.mxu0 %v172
  %426 = vmatpush1.bf16.msra.mxu0 %v171
  %427 = vmatprep.subr.bf16.mxu0 0
  %428 = vmatpush1.bf16.msra.mxu0 0
  %429 = vmatprep.subr.bf16.mxu0 0
  %430 = vmatpush1.bf16.msra.mxu0 0
  %431 = vmatprep.subr.bf16.mxu0 0
  %432 = vmatpush1.bf16.msra.mxu0 0
  %433 = vmatprep.subr.bf16.mxu0 0
  %434 = vmatpush1.bf16.msra.mxu0 0
  %435 = vmatprep.subr.bf16.mxu0 0
  %436 = vmatpush1.bf16.msra.mxu0 0
  %437 = vmatprep.subr.bf16.mxu0 0
  %438 = vmatpush1.bf16.msra.mxu0 0
  %439 = vmatprep.subr.bf16.mxu0 0
  %440 = vmatpush1.bf16.msra.mxu0 0
  %441 = vmatprep.subr.bf16.mxu0 0
  %442 = vmatpush1.bf16.msra.mxu0 0
  %443 = vmatprep.mubr.bf16.mxu0 0
  %444 = vmatmul.mubr.bf16.gmra.mrb[0].mxu0 %v395
  %v445 = vpop.f32.mrb[0].mxu0
  %v446 = vadd.f32 0.0, %v445
  %v447 = vpop.f32.mrb[0].mxu0
  %v448 = vadd.f32 0.0, %v447
  %v449 = vpop.f32.mrb[0].mxu0
  %v450 = vpop.f32.mrb[0].mxu0
  %451 = vdwg.mxu0
  %452 = vmatprep.subr.bf16.mxu0 %v295
  %453 = vmatpush1.bf16.msra.mxu0 %v294
  %454 = vmatprep.subr.bf16.mxu0 %v297
  %455 = vmatpush1.bf16.msra.mxu0 %v296
  %456 = vmatprep.subr.bf16.mxu0 %v299
  %457 = vmatpush1.bf16.msra.mxu0 %v298
  %458 = vmatprep.subr.bf16.mxu0 %v301
  %459 = vmatpush1.bf16.msra.mxu0 %v300
  %460 = vmatprep.subr.bf16.mxu0 %v303
  %461 = vmatpush1.bf16.msra.mxu0 %v302
  %462 = vmatprep.subr.bf16.mxu0 %v305
  %463 = vmatpush1.bf16.msra.mxu0 %v304
  %464 = vmatprep.subr.bf16.mxu0 %v307
  %465 = vmatpush1.bf16.msra.mxu0 %v306
  %466 = vmatprep.subr.bf16.mxu0 %v309
  %467 = vmatpush1.bf16.msra.mxu0 %v308
  %468 = vmatprep.subr.bf16.mxu0 0
  %469 = vmatpush1.bf16.msra.mxu0 0
  %470 = vmatprep.subr.bf16.mxu0 0
  %471 = vmatpush1.bf16.msra.mxu0 0
  %472 = vmatprep.subr.bf16.mxu0 0
  %473 = vmatpush1.bf16.msra.mxu0 0
  %474 = vmatprep.subr.bf16.mxu0 0
  %475 = vmatpush1.bf16.msra.mxu0 0
  %476 = vmatprep.subr.bf16.mxu0 0
  %477 = vmatpush1.bf16.msra.mxu0 0
  %478 = vmatprep.subr.bf16.mxu0 0
  %479 = vmatpush1.bf16.msra.mxu0 0
  %480 = vmatprep.subr.bf16.mxu0 0
  %481 = vmatpush1.bf16.msra.mxu0 0
  %482 = vmatprep.subr.bf16.mxu0 0
  %483 = vmatpush1.bf16.msra.mxu0 0
  %484 = vmatprep.mubr.bf16.mxu0 0
  %485 = vmatmul.mubr.bf16.gmra.mrb[0].mxu0 %v395
  %v486 = vpop.f32.mrb[0].mxu0
  %v487 = vadd.f32 0.0, %v486
  %v488 = vpop.f32.mrb[0].mxu0
  %v489 = vadd.f32 0.0, %v488
  %v490 = vpop.f32.mrb[0].mxu0
  %v491 = vpop.f32.mrb[0].mxu0
  %492 = vdwg.mxu0
  %v493 = vadd.f32 %v407, %v446
  %v494 = vadd.f32 %v408, %v448
  %v495 = vadd.f32 %v409, %v487
  %v496 = vadd.f32 %v410, %v489
  %v497 = vxor.u32 %v493, 2147483648
  %v498 = vmul.f32 %v497, 1.442695
  %v499 = vpow.pop %v498
  %v500 = vadd.f32 %v499, 1.0
  %v501 = vrcp.pop %v500
  %v502 = vmul.f32 1.0, %v501
  %v503 = vxor.u32 %v494, 2147483648
  %v504 = vmul.f32 %v503, 1.442695
  %v505 = vpow.pop %v504
  %v506 = vadd.f32 %v505, 1.0
  %v507 = vrcp.pop %v506
  %v508 = vmul.f32 1.0, %v507
  %v509 = vtanh.pop %v495
  %v510 = vxor.u32 %v496, 2147483648
  %v511 = vmul.f32 %v510, 1.442695
  %v512 = vpow.pop %v511
  %v513 = vadd.f32 %v512, 1.0
  %v514 = vrcp.pop %v513
  %v515 = vmul.f32 1.0, %v514
  %v516 = vmul.f32 %v508, %v392
  %v517 = vmul.f32 %v502, %v509
  %v518 = vadd.f32 %v516, %v517
  %v519 = vtanh.pop %v518
  %v520 = vmul.f32 %v515, %v519
  %v521 = vpack.c.bf16 %v520, %v520
  %s522 = scalar_lea.vmem %s0, 16
  %v523 = vld [vmem:[%s522] sm:$0xff]
  %525 = vset.pattern.permute.xlu0 0
  %526 = vperm.xlu0 %525, %v523
  %v527 = vpop.permute.xlu0 %526
  %v529 = vmul.f32 %v527, %v38
  %v530 = vmul.f32 %v527, %v42
  %v531 = vmul.f32 %v527, %v46
  %v532 = vmul.f32 %v527, %v50
  %v533 = vadd.f32 %v529, %v60
  %v534 = vadd.f32 %v530, %v64
  %v535 = vadd.f32 %v531, %v68
  %v536 = vadd.f32 %v532, %v72
  %537 = vmatprep.subr.bf16.mxu0 %v158
  %538 = vmatpush1.bf16.msra.mxu0 %v157
  %539 = vmatprep.subr.bf16.mxu0 %v160
  %540 = vmatpush1.bf16.msra.mxu0 %v159
  %541 = vmatprep.subr.bf16.mxu0 %v162
  %542 = vmatpush1.bf16.msra.mxu0 %v161
  %543 = vmatprep.subr.bf16.mxu0 %v164
  %544 = vmatpush1.bf16.msra.mxu0 %v163
  %545 = vmatprep.subr.bf16.mxu0 %v166
  %546 = vmatpush1.bf16.msra.mxu0 %v165
  %547 = vmatprep.subr.bf16.mxu0 %v168
  %548 = vmatpush1.bf16.msra.mxu0 %v167
  %549 = vmatprep.subr.bf16.mxu0 %v170
  %550 = vmatpush1.bf16.msra.mxu0 %v169
  %551 = vmatprep.subr.bf16.mxu0 %v172
  %552 = vmatpush1.bf16.msra.mxu0 %v171
  %553 = vmatprep.subr.bf16.mxu0 0
  %554 = vmatpush1.bf16.msra.mxu0 0
  %555 = vmatprep.subr.bf16.mxu0 0
  %556 = vmatpush1.bf16.msra.mxu0 0
  %557 = vmatprep.subr.bf16.mxu0 0
  %558 = vmatpush1.bf16.msra.mxu0 0
  %559 = vmatprep.subr.bf16.mxu0 0
  %560 = vmatpush1.bf16.msra.mxu0 0
  %561 = vmatprep.subr.bf16.mxu0 0
  %562 = vmatpush1.bf16.msra.mxu0 0
  %563 = vmatprep.subr.bf16.mxu0 0
  %564 = vmatpush1.bf16.msra.mxu0 0
  %565 = vmatprep.subr.bf16.mxu0 0
  %566 = vmatpush1.bf16.msra.mxu0 0
  %567 = vmatprep.subr.bf16.mxu0 0
  %568 = vmatpush1.bf16.msra.mxu0 0
  %569 = vmatprep.mubr.bf16.mxu0 0
  %570 = vmatmul.mubr.bf16.gmra.mrb[0].mxu0 %v521
  %v571 = vpop.f32.mrb[0].mxu0
  %v572 = vadd.f32 0.0, %v571
  %v573 = vpop.f32.mrb[0].mxu0
  %v574 = vadd.f32 0.0, %v573
  %v575 = vpop.f32.mrb[0].mxu0
  %v576 = vpop.f32.mrb[0].mxu0
  %577 = vdwg.mxu0
  %578 = vmatprep.subr.bf16.mxu0 %v295
  %579 = vmatpush1.bf16.msra.mxu0 %v294
  %580 = vmatprep.subr.bf16.mxu0 %v297
  %581 = vmatpush1.bf16.msra.mxu0 %v296
  %582 = vmatprep.subr.bf16.mxu0 %v299
  %583 = vmatpush1.bf16.msra.mxu0 %v298
  %584 = vmatprep.subr.bf16.mxu0 %v301
  %585 = vmatpush1.bf16.msra.mxu0 %v300
  %586 = vmatprep.subr.bf16.mxu0 %v303
  %587 = vmatpush1.bf16.msra.mxu0 %v302
  %588 = vmatprep.subr.bf16.mxu0 %v305
  %589 = vmatpush1.bf16.msra.mxu0 %v304
  %590 = vmatprep.subr.bf16.mxu0 %v307
  %591 = vmatpush1.bf16.msra.mxu0 %v306
  %592 = vmatprep.subr.bf16.mxu0 %v309
  %593 = vmatpush1.bf16.msra.mxu0 %v308
  %594 = vmatprep.subr.bf16.mxu0 0
  %595 = vmatpush1.bf16.msra.mxu0 0
  %596 = vmatprep.subr.bf16.mxu0 0
  %597 = vmatpush1.bf16.msra.mxu0 0
  %598 = vmatprep.subr.bf16.mxu0 0
  %599 = vmatpush1.bf16.msra.mxu0 0
  %600 = vmatprep.subr.bf16.mxu0 0
  %601 = vmatpush1.bf16.msra.mxu0 0
  %602 = vmatprep.subr.bf16.mxu0 0
  %603 = vmatpush1.bf16.msra.mxu0 0
  %604 = vmatprep.subr.bf16.mxu0 0
  %605 = vmatpush1.bf16.msra.mxu0 0
  %606 = vmatprep.subr.bf16.mxu0 0
  %607 = vmatpush1.bf16.msra.mxu0 0
  %608 = vmatprep.subr.bf16.mxu0 0
  %609 = vmatpush1.bf16.msra.mxu0 0
  %610 = vmatprep.mubr.bf16.mxu0 0
  %611 = vmatmul.mubr.bf16.gmra.mrb[0].mxu0 %v521
  %v612 = vpop.f32.mrb[0].mxu0
  %v613 = vadd.f32 0.0, %v612
  %v614 = vpop.f32.mrb[0].mxu0
  %v615 = vadd.f32 0.0, %v614
  %v616 = vpop.f32.mrb[0].mxu0
  %v617 = vpop.f32.mrb[0].mxu0
  %618 = vdwg.mxu0
  %v619 = vadd.f32 %v533, %v572
  %v620 = vadd.f32 %v534, %v574
  %v621 = vadd.f32 %v535, %v613
  %v622 = vadd.f32 %v536, %v615
  %v623 = vxor.u32 %v619, 2147483648
  %v624 = vmul.f32 %v623, 1.442695
  %v625 = vpow.pop %v624
  %v626 = vadd.f32 %v625, 1.0
  %v627 = vrcp.pop %v626
  %v628 = vmul.f32 1.0, %v627
  %v629 = vxor.u32 %v620, 2147483648
  %v630 = vmul.f32 %v629, 1.442695
  %v631 = vpow.pop %v630
  %v632 = vadd.f32 %v631, 1.0
  %v633 = vrcp.pop %v632
  %v634 = vmul.f32 1.0, %v633
  %v635 = vtanh.pop %v621
  %v636 = vxor.u32 %v622, 2147483648
  %v637 = vmul.f32 %v636, 1.442695
  %v638 = vpow.pop %v637
  %v639 = vadd.f32 %v638, 1.0
  %v640 = vrcp.pop %v639
  %v641 = vmul.f32 1.0, %v640
  %v642 = vmul.f32 %v634, %v518
  %v643 = vmul.f32 %v628, %v635
  %v644 = vadd.f32 %v642, %v643
  %v645 = vtanh.pop %v644
  %v646 = vmul.f32 %v641, %v645
  %v647 = vpack.c.bf16 %v646, %v646
  %s648 = scalar_lea.vmem %s0, 24
  %v649 = vld [vmem:[%s648] sm:$0xff]
  %651 = vset.pattern.permute.xlu0 0
  %652 = vperm.xlu0 %651, %v649
  %v653 = vpop.permute.xlu0 %652
  %v655 = vmul.f32 %v653, %v38
  %v656 = vmul.f32 %v653, %v42
  %v657 = vmul.f32 %v653, %v46
  %v658 = vmul.f32 %v653, %v50
  %v659 = vadd.f32 %v655, %v60
  %v660 = vadd.f32 %v656, %v64
  %v661 = vadd.f32 %v657, %v68
  %v662 = vadd.f32 %v658, %v72
  %663 = vmatprep.subr.bf16.mxu0 %v158
  %664 = vmatpush1.bf16.msra.mxu0 %v157
  %665 = vmatprep.subr.bf16.mxu0 %v160
  %666 = vmatpush1.bf16.msra.mxu0 %v159
  %667 = vmatprep.subr.bf16.mxu0 %v162
  %668 = vmatpush1.bf16.msra.mxu0 %v161
  %669 = vmatprep.subr.bf16.mxu0 %v164
  %670 = vmatpush1.bf16.msra.mxu0 %v163
  %671 = vmatprep.subr.bf16.mxu0 %v166
  %672 = vmatpush1.bf16.msra.mxu0 %v165
  %673 = vmatprep.subr.bf16.mxu0 %v168
  %674 = vmatpush1.bf16.msra.mxu0 %v167
  %675 = vmatprep.subr.bf16.mxu0 %v170
  %676 = vmatpush1.bf16.msra.mxu0 %v169
  %677 = vmatprep.subr.bf16.mxu0 %v172
  %678 = vmatpush1.bf16.msra.mxu0 %v171
  %679 = vmatprep.subr.bf16.mxu0 0
  %680 = vmatpush1.bf16.msra.mxu0 0
  %681 = vmatprep.subr.bf16.mxu0 0
  %682 = vmatpush1.bf16.msra.mxu0 0
  %683 = vmatprep.subr.bf16.mxu0 0
  %684 = vmatpush1.bf16.msra.mxu0 0
  %685 = vmatprep.subr.bf16.mxu0 0
  %686 = vmatpush1.bf16.msra.mxu0 0
  %687 = vmatprep.subr.bf16.mxu0 0
  %688 = vmatpush1.bf16.msra.mxu0 0
  %689 = vmatprep.subr.bf16.mxu0 0
  %690 = vmatpush1.bf16.msra.mxu0 0
  %691 = vmatprep.subr.bf16.mxu0 0
  %692 = vmatpush1.bf16.msra.mxu0 0
  %693 = vmatprep.subr.bf16.mxu0 0
  %694 = vmatpush1.bf16.msra.mxu0 0
  %695 = vmatprep.mubr.bf16.mxu0 0
  %696 = vmatmul.mubr.bf16.gmra.mrb[0].mxu0 %v647
  %v697 = vpop.f32.mrb[0].mxu0
  %v698 = vadd.f32 0.0, %v697
  %v699 = vpop.f32.mrb[0].mxu0
  %v700 = vadd.f32 0.0, %v699
  %v701 = vpop.f32.mrb[0].mxu0
  %v702 = vpop.f32.mrb[0].mxu0
  %703 = vdwg.mxu0
  %704 = vmatprep.subr.bf16.mxu0 %v295
  %705 = vmatpush1.bf16.msra.mxu0 %v294
  %706 = vmatprep.subr.bf16.mxu0 %v297
  %707 = vmatpush1.bf16.msra.mxu0 %v296
  %708 = vmatprep.subr.bf16.mxu0 %v299
  %709 = vmatpush1.bf16.msra.mxu0 %v298
  %710 = vmatprep.subr.bf16.mxu0 %v301
  %711 = vmatpush1.bf16.msra.mxu0 %v300
  %712 = vmatprep.subr.bf16.mxu0 %v303
  %713 = vmatpush1.bf16.msra.mxu0 %v302
  %714 = vmatprep.subr.bf16.mxu0 %v305
  %715 = vmatpush1.bf16.msra.mxu0 %v304
  %716 = vmatprep.subr.bf16.mxu0 %v307
  %717 = vmatpush1.bf16.msra.mxu0 %v306
  %718 = vmatprep.subr.bf16.mxu0 %v309
  %719 = vmatpush1.bf16.msra.mxu0 %v308
  %720 = vmatprep.subr.bf16.mxu0 0
  %721 = vmatpush1.bf16.msra.mxu0 0
  %722 = vmatprep.subr.bf16.mxu0 0
  %723 = vmatpush1.bf16.msra.mxu0 0
  %724 = vmatprep.subr.bf16.mxu0 0
  %725 = vmatpush1.bf16.msra.mxu0 0
  %726 = vmatprep.subr.bf16.mxu0 0
  %727 = vmatpush1.bf16.msra.mxu0 0
  %728 = vmatprep.subr.bf16.mxu0 0
  %729 = vmatpush1.bf16.msra.mxu0 0
  %730 = vmatprep.subr.bf16.mxu0 0
  %731 = vmatpush1.bf16.msra.mxu0 0
  %732 = vmatprep.subr.bf16.mxu0 0
  %733 = vmatpush1.bf16.msra.mxu0 0
  %734 = vmatprep.subr.bf16.mxu0 0
  %735 = vmatpush1.bf16.msra.mxu0 0
  %736 = vmatprep.mubr.bf16.mxu0 0
  %737 = vmatmul.mubr.bf16.gmra.mrb[0].mxu0 %v647
  %v738 = vpop.f32.mrb[0].mxu0
  %v739 = vadd.f32 0.0, %v738
  %v740 = vpop.f32.mrb[0].mxu0
  %v741 = vadd.f32 0.0, %v740
  %v742 = vpop.f32.mrb[0].mxu0
  %v743 = vpop.f32.mrb[0].mxu0
  %744 = vdwg.mxu0
  %v745 = vadd.f32 %v659, %v698
  %v746 = vadd.f32 %v660, %v700
  %v747 = vadd.f32 %v661, %v739
  %v748 = vadd.f32 %v662, %v741
  %v749 = vxor.u32 %v745, 2147483648
  %v750 = vmul.f32 %v749, 1.442695
  %v751 = vpow.pop %v750
  %v752 = vadd.f32 %v751, 1.0
  %v753 = vrcp.pop %v752
  %v754 = vmul.f32 1.0, %v753
  %v755 = vxor.u32 %v746, 2147483648
  %v756 = vmul.f32 %v755, 1.442695
  %v757 = vpow.pop %v756
  %v758 = vadd.f32 %v757, 1.0
  %v759 = vrcp.pop %v758
  %v760 = vmul.f32 1.0, %v759
  %v761 = vtanh.pop %v747
  %v762 = vxor.u32 %v748, 2147483648
  %v763 = vmul.f32 %v762, 1.442695
  %v764 = vpow.pop %v763
  %v765 = vadd.f32 %v764, 1.0
  %v766 = vrcp.pop %v765
  %v767 = vmul.f32 1.0, %v766
  %v768 = vmul.f32 %v760, %v644
  %v769 = vmul.f32 %v754, %v761
  %v770 = vadd.f32 %v768, %v769
  %v771 = vtanh.pop %v770
  %v772 = vmul.f32 %v767, %v771
  %v773 = vpack.c.bf16 %v772, %v772
  %s774 = scalar_lea.vmem %s0, 32
  %v775 = vld [vmem:[%s774] sm:$0xff]
  %777 = vset.pattern.permute.xlu0 0
  %778 = vperm.xlu0 %777, %v775
  %v779 = vpop.permute.xlu0 %778
  %v781 = vmul.f32 %v779, %v38
  %v782 = vmul.f32 %v779, %v42
  %v783 = vmul.f32 %v779, %v46
  %v784 = vmul.f32 %v779, %v50
  %v785 = vadd.f32 %v781, %v60
  %v786 = vadd.f32 %v782, %v64
  %v787 = vadd.f32 %v783, %v68
  %v788 = vadd.f32 %v784, %v72
  %789 = vmatprep.subr.bf16.mxu0 %v158
  %790 = vmatpush1.bf16.msra.mxu0 %v157
  %791 = vmatprep.subr.bf16.mxu0 %v160
  %792 = vmatpush1.bf16.msra.mxu0 %v159
  %793 = vmatprep.subr.bf16.mxu0 %v162
  %794 = vmatpush1.bf16.msra.mxu0 %v161
  %795 = vmatprep.subr.bf16.mxu0 %v164
  %796 = vmatpush1.bf16.msra.mxu0 %v163
  %797 = vmatprep.subr.bf16.mxu0 %v166
  %798 = vmatpush1.bf16.msra.mxu0 %v165
  %799 = vmatprep.subr.bf16.mxu0 %v168
  %800 = vmatpush1.bf16.msra.mxu0 %v167
  %801 = vmatprep.subr.bf16.mxu0 %v170
  %802 = vmatpush1.bf16.msra.mxu0 %v169
  %803 = vmatprep.subr.bf16.mxu0 %v172
  %804 = vmatpush1.bf16.msra.mxu0 %v171
  %805 = vmatprep.subr.bf16.mxu0 0
  %806 = vmatpush1.bf16.msra.mxu0 0
  %807 = vmatprep.subr.bf16.mxu0 0
  %808 = vmatpush1.bf16.msra.mxu0 0
  %809 = vmatprep.subr.bf16.mxu0 0
  %810 = vmatpush1.bf16.msra.mxu0 0
  %811 = vmatprep.subr.bf16.mxu0 0
  %812 = vmatpush1.bf16.msra.mxu0 0
  %813 = vmatprep.subr.bf16.mxu0 0
  %814 = vmatpush1.bf16.msra.mxu0 0
  %815 = vmatprep.subr.bf16.mxu0 0
  %816 = vmatpush1.bf16.msra.mxu0 0
  %817 = vmatprep.subr.bf16.mxu0 0
  %818 = vmatpush1.bf16.msra.mxu0 0
  %819 = vmatprep.subr.bf16.mxu0 0
  %820 = vmatpush1.bf16.msra.mxu0 0
  %821 = vmatprep.mubr.bf16.mxu0 0
  %822 = vmatmul.mubr.bf16.gmra.mrb[0].mxu0 %v773
  %v823 = vpop.f32.mrb[0].mxu0
  %v824 = vadd.f32 0.0, %v823
  %v825 = vpop.f32.mrb[0].mxu0
  %v826 = vadd.f32 0.0, %v825
  %v827 = vpop.f32.mrb[0].mxu0
  %v828 = vpop.f32.mrb[0].mxu0
  %829 = vdwg.mxu0
  %830 = vmatprep.subr.bf16.mxu0 %v295
  %831 = vmatpush1.bf16.msra.mxu0 %v294
  %832 = vmatprep.subr.bf16.mxu0 %v297
  %833 = vmatpush1.bf16.msra.mxu0 %v296
  %834 = vmatprep.subr.bf16.mxu0 %v299
  %835 = vmatpush1.bf16.msra.mxu0 %v298
  %836 = vmatprep.subr.bf16.mxu0 %v301
  %837 = vmatpush1.bf16.msra.mxu0 %v300
  %838 = vmatprep.subr.bf16.mxu0 %v303
  %839 = vmatpush1.bf16.msra.mxu0 %v302
  %840 = vmatprep.subr.bf16.mxu0 %v305
  %841 = vmatpush1.bf16.msra.mxu0 %v304
  %842 = vmatprep.subr.bf16.mxu0 %v307
  %843 = vmatpush1.bf16.msra.mxu0 %v306
  %844 = vmatprep.subr.bf16.mxu0 %v309
  %845 = vmatpush1.bf16.msra.mxu0 %v308
  %846 = vmatprep.subr.bf16.mxu0 0
  %847 = vmatpush1.bf16.msra.mxu0 0
  %848 = vmatprep.subr.bf16.mxu0 0
  %849 = vmatpush1.bf16.msra.mxu0 0
  %850 = vmatprep.subr.bf16.mxu0 0
  %851 = vmatpush1.bf16.msra.mxu0 0
  %852 = vmatprep.subr.bf16.mxu0 0
  %853 = vmatpush1.bf16.msra.mxu0 0
  %854 = vmatprep.subr.bf16.mxu0 0
  %855 = vmatpush1.bf16.msra.mxu0 0
  %856 = vmatprep.subr.bf16.mxu0 0
  %857 = vmatpush1.bf16.msra.mxu0 0
  %858 = vmatprep.subr.bf16.mxu0 0
  %859 = vmatpush1.bf16.msra.mxu0 0
  %860 = vmatprep.subr.bf16.mxu0 0
  %861 = vmatpush1.bf16.msra.mxu0 0
  %862 = vmatprep.mubr.bf16.mxu0 0
  %863 = vmatmul.mubr.bf16.gmra.mrb[0].mxu0 %v773
  %v864 = vpop.f32.mrb[0].mxu0
  %v865 = vadd.f32 0.0, %v864
  %v866 = vpop.f32.mrb[0].mxu0
  %v867 = vadd.f32 0.0, %v866
  %v868 = vpop.f32.mrb[0].mxu0
  %v869 = vpop.f32.mrb[0].mxu0
  %870 = vdwg.mxu0
  %v871 = vadd.f32 %v785, %v824
  %v872 = vadd.f32 %v786, %v826
  %v873 = vadd.f32 %v787, %v865
  %v874 = vadd.f32 %v788, %v867
  %v875 = vxor.u32 %v871, 2147483648
  %v876 = vmul.f32 %v875, 1.442695
  %v877 = vpow.pop %v876
  %v878 = vadd.f32 %v877, 1.0
  %v879 = vrcp.pop %v878
  %v880 = vmul.f32 1.0, %v879
  %v881 = vxor.u32 %v872, 2147483648
  %v882 = vmul.f32 %v881, 1.442695
  %v883 = vpow.pop %v882
  %v884 = vadd.f32 %v883, 1.0
  %v885 = vrcp.pop %v884
  %v886 = vmul.f32 1.0, %v885
  %v887 = vtanh.pop %v873
  %v888 = vxor.u32 %v874, 2147483648
  %v889 = vmul.f32 %v888, 1.442695
  %v890 = vpow.pop %v889
  %v891 = vadd.f32 %v890, 1.0
  %v892 = vrcp.pop %v891
  %v893 = vmul.f32 1.0, %v892
  %v894 = vmul.f32 %v886, %v770
  %v895 = vmul.f32 %v880, %v887
  %v896 = vadd.f32 %v894, %v895
  %v897 = vtanh.pop %v896
  %v898 = vmul.f32 %v893, %v897
  %v899 = vpack.c.bf16 %v898, %v898
  %s900 = scalar_lea.vmem %s0, 40
  %v901 = vld [vmem:[%s900] sm:$0xff]
  %903 = vset.pattern.permute.xlu0 0
  %904 = vperm.xlu0 %903, %v901
  %v905 = vpop.permute.xlu0 %904
  %v907 = vmul.f32 %v905, %v38
  %v908 = vmul.f32 %v905, %v42
  %v909 = vmul.f32 %v905, %v46
  %v910 = vmul.f32 %v905, %v50
  %v911 = vadd.f32 %v907, %v60
  %v912 = vadd.f32 %v908, %v64
  %v913 = vadd.f32 %v909, %v68
  %v914 = vadd.f32 %v910, %v72
  %915 = vmatprep.subr.bf16.mxu0 %v158
  %916 = vmatpush1.bf16.msra.mxu0 %v157
  %917 = vmatprep.subr.bf16.mxu0 %v160
  %918 = vmatpush1.bf16.msra.mxu0 %v159
  %919 = vmatprep.subr.bf16.mxu0 %v162
  %920 = vmatpush1.bf16.msra.mxu0 %v161
  %921 = vmatprep.subr.bf16.mxu0 %v164
  %922 = vmatpush1.bf16.msra.mxu0 %v163
  %923 = vmatprep.subr.bf16.mxu0 %v166
  %924 = vmatpush1.bf16.msra.mxu0 %v165
  %925 = vmatprep.subr.bf16.mxu0 %v168
  %926 = vmatpush1.bf16.msra.mxu0 %v167
  %927 = vmatprep.subr.bf16.mxu0 %v170
  %928 = vmatpush1.bf16.msra.mxu0 %v169
  %929 = vmatprep.subr.bf16.mxu0 %v172
  %930 = vmatpush1.bf16.msra.mxu0 %v171
  %931 = vmatprep.subr.bf16.mxu0 0
  %932 = vmatpush1.bf16.msra.mxu0 0
  %933 = vmatprep.subr.bf16.mxu0 0
  %934 = vmatpush1.bf16.msra.mxu0 0
  %935 = vmatprep.subr.bf16.mxu0 0
  %936 = vmatpush1.bf16.msra.mxu0 0
  %937 = vmatprep.subr.bf16.mxu0 0
  %938 = vmatpush1.bf16.msra.mxu0 0
  %939 = vmatprep.subr.bf16.mxu0 0
  %940 = vmatpush1.bf16.msra.mxu0 0
  %941 = vmatprep.subr.bf16.mxu0 0
  %942 = vmatpush1.bf16.msra.mxu0 0
  %943 = vmatprep.subr.bf16.mxu0 0
  %944 = vmatpush1.bf16.msra.mxu0 0
  %945 = vmatprep.subr.bf16.mxu0 0
  %946 = vmatpush1.bf16.msra.mxu0 0
  %947 = vmatprep.mubr.bf16.mxu0 0
  %948 = vmatmul.mubr.bf16.gmra.mrb[0].mxu0 %v899
  %v949 = vpop.f32.mrb[0].mxu0
  %v950 = vadd.f32 0.0, %v949
  %v951 = vpop.f32.mrb[0].mxu0
  %v952 = vadd.f32 0.0, %v951
  %v953 = vpop.f32.mrb[0].mxu0
  %v954 = vpop.f32.mrb[0].mxu0
  %955 = vdwg.mxu0
  %956 = vmatprep.subr.bf16.mxu0 %v295
  %957 = vmatpush1.bf16.msra.mxu0 %v294
  %958 = vmatprep.subr.bf16.mxu0 %v297
  %959 = vmatpush1.bf16.msra.mxu0 %v296
  %960 = vmatprep.subr.bf16.mxu0 %v299
  %961 = vmatpush1.bf16.msra.mxu0 %v298
  %962 = vmatprep.subr.bf16.mxu0 %v301
  %963 = vmatpush1.bf16.msra.mxu0 %v300
  %964 = vmatprep.subr.bf16.mxu0 %v303
  %965 = vmatpush1.bf16.msra.mxu0 %v302
  %966 = vmatprep.subr.bf16.mxu0 %v305
  %967 = vmatpush1.bf16.msra.mxu0 %v304
  %968 = vmatprep.subr.bf16.mxu0 %v307
  %969 = vmatpush1.bf16.msra.mxu0 %v306
  %970 = vmatprep.subr.bf16.mxu0 %v309
  %971 = vmatpush1.bf16.msra.mxu0 %v308
  %972 = vmatprep.subr.bf16.mxu0 0
  %973 = vmatpush1.bf16.msra.mxu0 0
  %974 = vmatprep.subr.bf16.mxu0 0
  %975 = vmatpush1.bf16.msra.mxu0 0
  %976 = vmatprep.subr.bf16.mxu0 0
  %977 = vmatpush1.bf16.msra.mxu0 0
  %978 = vmatprep.subr.bf16.mxu0 0
  %979 = vmatpush1.bf16.msra.mxu0 0
  %980 = vmatprep.subr.bf16.mxu0 0
  %981 = vmatpush1.bf16.msra.mxu0 0
  %982 = vmatprep.subr.bf16.mxu0 0
  %983 = vmatpush1.bf16.msra.mxu0 0
  %984 = vmatprep.subr.bf16.mxu0 0
  %985 = vmatpush1.bf16.msra.mxu0 0
  %986 = vmatprep.subr.bf16.mxu0 0
  %987 = vmatpush1.bf16.msra.mxu0 0
  %988 = vmatprep.mubr.bf16.mxu0 0
  %989 = vmatmul.mubr.bf16.gmra.mrb[0].mxu0 %v899
  %v990 = vpop.f32.mrb[0].mxu0
  %v991 = vadd.f32 0.0, %v990
  %v992 = vpop.f32.mrb[0].mxu0
  %v993 = vadd.f32 0.0, %v992
  %v994 = vpop.f32.mrb[0].mxu0
  %v995 = vpop.f32.mrb[0].mxu0
  %996 = vdwg.mxu0
  %v997 = vadd.f32 %v911, %v950
  %v998 = vadd.f32 %v912, %v952
  %v999 = vadd.f32 %v913, %v991
  %v1000 = vadd.f32 %v914, %v993
  %v1001 = vxor.u32 %v997, 2147483648
  %v1002 = vmul.f32 %v1001, 1.442695
  %v1003 = vpow.pop %v1002
  %v1004 = vadd.f32 %v1003, 1.0
  %v1005 = vrcp.pop %v1004
  %v1006 = vmul.f32 1.0, %v1005
  %v1007 = vxor.u32 %v998, 2147483648
  %v1008 = vmul.f32 %v1007, 1.442695
  %v1009 = vpow.pop %v1008
  %v1010 = vadd.f32 %v1009, 1.0
  %v1011 = vrcp.pop %v1010
  %v1012 = vmul.f32 1.0, %v1011
  %v1013 = vtanh.pop %v999
  %v1014 = vxor.u32 %v1000, 2147483648
  %v1015 = vmul.f32 %v1014, 1.442695
  %v1016 = vpow.pop %v1015
  %v1017 = vadd.f32 %v1016, 1.0
  %v1018 = vrcp.pop %v1017
  %v1019 = vmul.f32 1.0, %v1018
  %v1020 = vmul.f32 %v1012, %v896
  %v1021 = vmul.f32 %v1006, %v1013
  %v1022 = vadd.f32 %v1020, %v1021
  %v1023 = vtanh.pop %v1022
  %v1024 = vmul.f32 %v1019, %v1023
  %v1025 = vpack.c.bf16 %v1024, %v1024
  %s1026 = scalar_lea.vmem %s0, 48
  %v1027 = vld [vmem:[%s1026] sm:$0xff]
  %1029 = vset.pattern.permute.xlu0 0
  %1030 = vperm.xlu0 %1029, %v1027
  %v1031 = vpop.permute.xlu0 %1030
  %v1033 = vmul.f32 %v1031, %v38
  %v1034 = vmul.f32 %v1031, %v42
  %v1035 = vmul.f32 %v1031, %v46
  %v1036 = vmul.f32 %v1031, %v50
  %v1037 = vadd.f32 %v1033, %v60
  %v1038 = vadd.f32 %v1034, %v64
  %v1039 = vadd.f32 %v1035, %v68
  %v1040 = vadd.f32 %v1036, %v72
  %1041 = vmatprep.subr.bf16.mxu0 %v158
  %1042 = vmatpush1.bf16.msra.mxu0 %v157
  %1043 = vmatprep.subr.bf16.mxu0 %v160
  %1044 = vmatpush1.bf16.msra.mxu0 %v159
  %1045 = vmatprep.subr.bf16.mxu0 %v162
  %1046 = vmatpush1.bf16.msra.mxu0 %v161
  %1047 = vmatprep.subr.bf16.mxu0 %v164
  %1048 = vmatpush1.bf16.msra.mxu0 %v163
  %1049 = vmatprep.subr.bf16.mxu0 %v166
  %1050 = vmatpush1.bf16.msra.mxu0 %v165
  %1051 = vmatprep.subr.bf16.mxu0 %v168
  %1052 = vmatpush1.bf16.msra.mxu0 %v167
  %1053 = vmatprep.subr.bf16.mxu0 %v170
  %1054 = vmatpush1.bf16.msra.mxu0 %v169
  %1055 = vmatprep.subr.bf16.mxu0 %v172
  %1056 = vmatpush1.bf16.msra.mxu0 %v171
  %1057 = vmatprep.subr.bf16.mxu0 0
  %1058 = vmatpush1.bf16.msra.mxu0 0
  %1059 = vmatprep.subr.bf16.mxu0 0
  %1060 = vmatpush1.bf16.msra.mxu0 0
  %1061 = vmatprep.subr.bf16.mxu0 0
  %1062 = vmatpush1.bf16.msra.mxu0 0
  %1063 = vmatprep.subr.bf16.mxu0 0
  %1064 = vmatpush1.bf16.msra.mxu0 0
  %1065 = vmatprep.subr.bf16.mxu0 0
  %1066 = vmatpush1.bf16.msra.mxu0 0
  %1067 = vmatprep.subr.bf16.mxu0 0
  %1068 = vmatpush1.bf16.msra.mxu0 0
  %1069 = vmatprep.subr.bf16.mxu0 0
  %1070 = vmatpush1.bf16.msra.mxu0 0
  %1071 = vmatprep.subr.bf16.mxu0 0
  %1072 = vmatpush1.bf16.msra.mxu0 0
  %1073 = vmatprep.mubr.bf16.mxu0 0
  %1074 = vmatmul.mubr.bf16.gmra.mrb[0].mxu0 %v1025
  %v1075 = vpop.f32.mrb[0].mxu0
  %v1076 = vadd.f32 0.0, %v1075
  %v1077 = vpop.f32.mrb[0].mxu0
  %v1078 = vadd.f32 0.0, %v1077
  %v1079 = vpop.f32.mrb[0].mxu0
  %v1080 = vpop.f32.mrb[0].mxu0
  %1081 = vdwg.mxu0
  %1082 = vmatprep.subr.bf16.mxu0 %v295
  %1083 = vmatpush1.bf16.msra.mxu0 %v294
  %1084 = vmatprep.subr.bf16.mxu0 %v297
  %1085 = vmatpush1.bf16.msra.mxu0 %v296
  %1086 = vmatprep.subr.bf16.mxu0 %v299
  %1087 = vmatpush1.bf16.msra.mxu0 %v298
  %1088 = vmatprep.subr.bf16.mxu0 %v301
  %1089 = vmatpush1.bf16.msra.mxu0 %v300
  %1090 = vmatprep.subr.bf16.mxu0 %v303
  %1091 = vmatpush1.bf16.msra.mxu0 %v302
  %1092 = vmatprep.subr.bf16.mxu0 %v305
  %1093 = vmatpush1.bf16.msra.mxu0 %v304
  %1094 = vmatprep.subr.bf16.mxu0 %v307
  %1095 = vmatpush1.bf16.msra.mxu0 %v306
  %1096 = vmatprep.subr.bf16.mxu0 %v309
  %1097 = vmatpush1.bf16.msra.mxu0 %v308
  %1098 = vmatprep.subr.bf16.mxu0 0
  %1099 = vmatpush1.bf16.msra.mxu0 0
  %1100 = vmatprep.subr.bf16.mxu0 0
  %1101 = vmatpush1.bf16.msra.mxu0 0
  %1102 = vmatprep.subr.bf16.mxu0 0
  %1103 = vmatpush1.bf16.msra.mxu0 0
  %1104 = vmatprep.subr.bf16.mxu0 0
  %1105 = vmatpush1.bf16.msra.mxu0 0
  %1106 = vmatprep.subr.bf16.mxu0 0
  %1107 = vmatpush1.bf16.msra.mxu0 0
  %1108 = vmatprep.subr.bf16.mxu0 0
  %1109 = vmatpush1.bf16.msra.mxu0 0
  %1110 = vmatprep.subr.bf16.mxu0 0
  %1111 = vmatpush1.bf16.msra.mxu0 0
  %1112 = vmatprep.subr.bf16.mxu0 0
  %1113 = vmatpush1.bf16.msra.mxu0 0
  %1114 = vmatprep.mubr.bf16.mxu0 0
  %1115 = vmatmul.mubr.bf16.gmra.mrb[0].mxu0 %v1025
  %v1116 = vpop.f32.mrb[0].mxu0
  %v1117 = vadd.f32 0.0, %v1116
  %v1118 = vpop.f32.mrb[0].mxu0
  %v1119 = vadd.f32 0.0, %v1118
  %v1120 = vpop.f32.mrb[0].mxu0
  %v1121 = vpop.f32.mrb[0].mxu0
  %1122 = vdwg.mxu0
  %v1123 = vadd.f32 %v1037, %v1076
  %v1124 = vadd.f32 %v1038, %v1078
  %v1125 = vadd.f32 %v1039, %v1117
  %v1126 = vadd.f32 %v1040, %v1119
  %v1127 = vxor.u32 %v1123, 2147483648
  %v1128 = vmul.f32 %v1127, 1.442695
  %v1129 = vpow.pop %v1128
  %v1130 = vadd.f32 %v1129, 1.0
  %v1131 = vrcp.pop %v1130
  %v1132 = vmul.f32 1.0, %v1131
  %v1133 = vxor.u32 %v1124, 2147483648
  %v1134 = vmul.f32 %v1133, 1.442695
  %v1135 = vpow.pop %v1134
  %v1136 = vadd.f32 %v1135, 1.0
  %v1137 = vrcp.pop %v1136
  %v1138 = vmul.f32 1.0, %v1137
  %v1139 = vtanh.pop %v1125
  %v1140 = vxor.u32 %v1126, 2147483648
  %v1141 = vmul.f32 %v1140, 1.442695
  %v1142 = vpow.pop %v1141
  %v1143 = vadd.f32 %v1142, 1.0
  %v1144 = vrcp.pop %v1143
  %v1145 = vmul.f32 1.0, %v1144
  %v1146 = vmul.f32 %v1138, %v1022
  %v1147 = vmul.f32 %v1132, %v1139
  %v1148 = vadd.f32 %v1146, %v1147
  %v1149 = vtanh.pop %v1148
  %v1150 = vmul.f32 %v1145, %v1149
  %v1151 = vpack.c.bf16 %v1150, %v1150
  %s1152 = scalar_lea.vmem %s0, 56
  %v1153 = vld [vmem:[%s1152] sm:$0xff]
  %1155 = vset.pattern.permute.xlu0 0
  %1156 = vperm.xlu0 %1155, %v1153
  %v1157 = vpop.permute.xlu0 %1156
  %v1159 = vmul.f32 %v1157, %v38
  %v1160 = vmul.f32 %v1157, %v42
  %v1161 = vmul.f32 %v1157, %v46
  %v1162 = vmul.f32 %v1157, %v50
  %v1163 = vadd.f32 %v1159, %v60
  %v1164 = vadd.f32 %v1160, %v64
  %v1165 = vadd.f32 %v1161, %v68
  %v1166 = vadd.f32 %v1162, %v72
  %1167 = vmatprep.subr.bf16.mxu0 %v158
  %1168 = vmatpush1.bf16.msra.mxu0 %v157
  %1169 = vmatprep.subr.bf16.mxu0 %v160
  %1170 = vmatpush1.bf16.msra.mxu0 %v159
  %1171 = vmatprep.subr.bf16.mxu0 %v162
  %1172 = vmatpush1.bf16.msra.mxu0 %v161
  %1173 = vmatprep.subr.bf16.mxu0 %v164
  %1174 = vmatpush1.bf16.msra.mxu0 %v163
  %1175 = vmatprep.subr.bf16.mxu0 %v166
  %1176 = vmatpush1.bf16.msra.mxu0 %v165
  %1177 = vmatprep.subr.bf16.mxu0 %v168
  %1178 = vmatpush1.bf16.msra.mxu0 %v167
  %1179 = vmatprep.subr.bf16.mxu0 %v170
  %1180 = vmatpush1.bf16.msra.mxu0 %v169
  %1181 = vmatprep.subr.bf16.mxu0 %v172
  %1182 = vmatpush1.bf16.msra.mxu0 %v171
  %1183 = vmatprep.subr.bf16.mxu0 0
  %1184 = vmatpush1.bf16.msra.mxu0 0
  %1185 = vmatprep.subr.bf16.mxu0 0
  %1186 = vmatpush1.bf16.msra.mxu0 0
  %1187 = vmatprep.subr.bf16.mxu0 0
  %1188 = vmatpush1.bf16.msra.mxu0 0
  %1189 = vmatprep.subr.bf16.mxu0 0
  %1190 = vmatpush1.bf16.msra.mxu0 0
  %1191 = vmatprep.subr.bf16.mxu0 0
  %1192 = vmatpush1.bf16.msra.mxu0 0
  %1193 = vmatprep.subr.bf16.mxu0 0
  %1194 = vmatpush1.bf16.msra.mxu0 0
  %1195 = vmatprep.subr.bf16.mxu0 0
  %1196 = vmatpush1.bf16.msra.mxu0 0
  %1197 = vmatprep.subr.bf16.mxu0 0
  %1198 = vmatpush1.bf16.msra.mxu0 0
  %1199 = vmatprep.mubr.bf16.mxu0 0
  %1200 = vmatmul.mubr.bf16.gmra.mrb[0].mxu0 %v1151
  %v1201 = vpop.f32.mrb[0].mxu0
  %v1202 = vadd.f32 0.0, %v1201
  %v1203 = vpop.f32.mrb[0].mxu0
  %v1204 = vadd.f32 0.0, %v1203
  %v1205 = vpop.f32.mrb[0].mxu0
  %v1206 = vpop.f32.mrb[0].mxu0
  %1207 = vdwg.mxu0
  %1208 = vmatprep.subr.bf16.mxu0 %v295
  %1209 = vmatpush1.bf16.msra.mxu0 %v294
  %1210 = vmatprep.subr.bf16.mxu0 %v297
  %1211 = vmatpush1.bf16.msra.mxu0 %v296
  %1212 = vmatprep.subr.bf16.mxu0 %v299
  %1213 = vmatpush1.bf16.msra.mxu0 %v298
  %1214 = vmatprep.subr.bf16.mxu0 %v301
  %1215 = vmatpush1.bf16.msra.mxu0 %v300
  %1216 = vmatprep.subr.bf16.mxu0 %v303
  %1217 = vmatpush1.bf16.msra.mxu0 %v302
  %1218 = vmatprep.subr.bf16.mxu0 %v305
  %1219 = vmatpush1.bf16.msra.mxu0 %v304
  %1220 = vmatprep.subr.bf16.mxu0 %v307
  %1221 = vmatpush1.bf16.msra.mxu0 %v306
  %1222 = vmatprep.subr.bf16.mxu0 %v309
  %1223 = vmatpush1.bf16.msra.mxu0 %v308
  %1224 = vmatprep.subr.bf16.mxu0 0
  %1225 = vmatpush1.bf16.msra.mxu0 0
  %1226 = vmatprep.subr.bf16.mxu0 0
  %1227 = vmatpush1.bf16.msra.mxu0 0
  %1228 = vmatprep.subr.bf16.mxu0 0
  %1229 = vmatpush1.bf16.msra.mxu0 0
  %1230 = vmatprep.subr.bf16.mxu0 0
  %1231 = vmatpush1.bf16.msra.mxu0 0
  %1232 = vmatprep.subr.bf16.mxu0 0
  %1233 = vmatpush1.bf16.msra.mxu0 0
  %1234 = vmatprep.subr.bf16.mxu0 0
  %1235 = vmatpush1.bf16.msra.mxu0 0
  %1236 = vmatprep.subr.bf16.mxu0 0
  %1237 = vmatpush1.bf16.msra.mxu0 0
  %1238 = vmatprep.subr.bf16.mxu0 0
  %1239 = vmatpush1.bf16.msra.mxu0 0
  %1240 = vmatprep.mubr.bf16.mxu0 0
  %1241 = vmatmul.mubr.bf16.gmra.mrb[0].mxu0 %v1151
  %v1242 = vpop.f32.mrb[0].mxu0
  %v1243 = vadd.f32 0.0, %v1242
  %v1244 = vpop.f32.mrb[0].mxu0
  %v1245 = vadd.f32 0.0, %v1244
  %v1246 = vpop.f32.mrb[0].mxu0
  %v1247 = vpop.f32.mrb[0].mxu0
  %1248 = vdwg.mxu0
  %v1249 = vadd.f32 %v1163, %v1202
  %v1250 = vadd.f32 %v1164, %v1204
  %v1251 = vadd.f32 %v1165, %v1243
  %v1252 = vadd.f32 %v1166, %v1245
  %v1253 = vxor.u32 %v1249, 2147483648
  %v1254 = vmul.f32 %v1253, 1.442695
  %v1255 = vpow.pop %v1254
  %v1256 = vadd.f32 %v1255, 1.0
  %v1257 = vrcp.pop %v1256
  %v1258 = vmul.f32 1.0, %v1257
  %v1259 = vxor.u32 %v1250, 2147483648
  %v1260 = vmul.f32 %v1259, 1.442695
  %v1261 = vpow.pop %v1260
  %v1262 = vadd.f32 %v1261, 1.0
  %v1263 = vrcp.pop %v1262
  %v1264 = vmul.f32 1.0, %v1263
  %v1265 = vtanh.pop %v1251
  %v1266 = vxor.u32 %v1252, 2147483648
  %v1267 = vmul.f32 %v1266, 1.442695
  %v1268 = vpow.pop %v1267
  %v1269 = vadd.f32 %v1268, 1.0
  %v1270 = vrcp.pop %v1269
  %v1271 = vmul.f32 1.0, %v1270
  %v1272 = vmul.f32 %v1264, %v1148
  %v1273 = vmul.f32 %v1258, %v1265
  %v1274 = vadd.f32 %v1272, %v1273
  %v1275 = vtanh.pop %v1274
  %v1276 = vmul.f32 %v1271, %v1275
  %v1277 = vpack.c.bf16 %v1276, %v1276
  %1278 = vst [vmem:[#allocation2] sm:$0xf] %v1277
  %1279 = vst [vmem:[#allocation3] sm:$0xff] %v1274
  // Predicated region
  $region34: #{lstm_net_forward.1} parent=0 // pred_check
    %p1280 = pneg %p27
  $region35: #{lstm_net_forward.1} parent=0 // pred_check_branch
    %1282 = sbr.rel (%p1280) target = $region37
  $region36: #{lstm_net_forward.1} parent=0 // pred_region
    %v1283 = vunpack.c.l.bf16 %v1277
    %v1284 = vtanh.pop %v1283
    %v1285 = vld [vmem:[%s5] sm:$0xff]
    %v1286 = vld [vmem:[%s5 + $0x8] sm:$0xff]
    %v1287 = vld [vmem:[%s5 + $0x10] sm:$0xff]
    %v1288 = vld [vmem:[%s5 + $0x18] sm:$0xff]
    %v1289 = vld [vmem:[%s5 + $0x20] sm:$0xff]
    %v1290 = vld [vmem:[%s5 + $0x28] sm:$0xff]
    %v1291 = vld [vmem:[%s5 + $0x30] sm:$0xff]
    %v1292 = vld [vmem:[%s5 + $0x38] sm:$0xff]
    %v1293 = vld [vmem:[%s5 + $0x40] sm:$0xff]
    %v1294 = vld [vmem:[%s5 + $0x48] sm:$0xff]
    %v1295 = vld [vmem:[%s5 + $0x50] sm:$0xff]
    %v1296 = vld [vmem:[%s5 + $0x58] sm:$0xff]
    %v1297 = vld [vmem:[%s5 + $0x60] sm:$0xff]
    %v1298 = vld [vmem:[%s5 + $0x68] sm:$0xff]
    %v1299 = vld [vmem:[%s5 + $0x70] sm:$0xff]
    %v1300 = vld [vmem:[%s5 + $0x78] sm:$0xff]
    %v1301 = vld [vmem:[%s6] sm:$0x1]
    %v1303 = vlaneseq
    %v1304 = vshrl.u32 %v1303, 7
    %v1305 = vsub.s32 0, %v1304
    %v1306 = vrot.slane %v1301, %v1305
    %1308 = vmatprep.subr.mxu0 0.0
    %1309 = vmatpush1.msra.mxu0 %v1285
    %1310 = vmatprep.subr.mxu0 0.0
    %1311 = vmatpush1.msra.mxu0 %v1286
    %1312 = vmatprep.subr.mxu0 0.0
    %1313 = vmatpush1.msra.mxu0 %v1287
    %1314 = vmatprep.subr.mxu0 0.0
    %1315 = vmatpush1.msra.mxu0 %v1288
    %1316 = vmatprep.subr.mxu0 0.0
    %1317 = vmatpush1.msra.mxu0 %v1289
    %1318 = vmatprep.subr.mxu0 0.0
    %1319 = vmatpush1.msra.mxu0 %v1290
    %1320 = vmatprep.subr.mxu0 0.0
    %1321 = vmatpush1.msra.mxu0 %v1291
    %1322 = vmatprep.subr.mxu0 0.0
    %1323 = vmatpush1.msra.mxu0 %v1292
    %1324 = vmatprep.subr.mxu0 0.0
    %1325 = vmatpush1.msra.mxu0 %v1293
    %1326 = vmatprep.subr.mxu0 0.0
    %1327 = vmatpush1.msra.mxu0 %v1294
    %1328 = vmatprep.subr.mxu0 0.0
    %1329 = vmatpush1.msra.mxu0 %v1295
    %1330 = vmatprep.subr.mxu0 0.0
    %1331 = vmatpush1.msra.mxu0 %v1296
    %1332 = vmatprep.subr.mxu0 0.0
    %1333 = vmatpush1.msra.mxu0 %v1297
    %1334 = vmatprep.subr.mxu0 0.0
    %1335 = vmatpush1.msra.mxu0 %v1298
    %1336 = vmatprep.subr.mxu0 0.0
    %1337 = vmatpush1.msra.mxu0 %v1299
    %1338 = vmatprep.subr.mxu0 0.0
    %1339 = vmatpush1.msra.mxu0 %v1300
    %1340 = vmatprep.subr.mxu0 0.0
    %1341 = vmatpush1.msra.mxu0 0.0
    %1342 = vmatprep.subr.mxu0 0.0
    %1343 = vmatpush1.msra.mxu0 0.0
    %1344 = vmatprep.subr.mxu0 0.0
    %1345 = vmatpush1.msra.mxu0 0.0
    %1346 = vmatprep.subr.mxu0 0.0
    %1347 = vmatpush1.msra.mxu0 0.0
    %1348 = vmatprep.subr.mxu0 0.0
    %1349 = vmatpush1.msra.mxu0 0.0
    %1350 = vmatprep.subr.mxu0 0.0
    %1351 = vmatpush1.msra.mxu0 0.0
    %1352 = vmatprep.subr.mxu0 0.0
    %1353 = vmatpush1.msra.mxu0 0.0
    %1354 = vmatprep.subr.mxu0 0.0
    %1355 = vmatpush1.msra.mxu0 0.0
    %1356 = vmatprep.subr.mxu0 0.0
    %1357 = vmatpush1.msra.mxu0 0.0
    %1358 = vmatprep.subr.mxu0 0.0
    %1359 = vmatpush1.msra.mxu0 0.0
    %1360 = vmatprep.subr.mxu0 0.0
    %1361 = vmatpush1.msra.mxu0 0.0
    %1362 = vmatprep.subr.mxu0 0.0
    %1363 = vmatpush1.msra.mxu0 0.0
    %1364 = vmatprep.subr.mxu0 0.0
    %1365 = vmatpush1.msra.mxu0 0.0
    %1366 = vmatprep.subr.mxu0 0.0
    %1367 = vmatpush1.msra.mxu0 0.0
    %1368 = vmatprep.subr.mxu0 0.0
    %1369 = vmatpush1.msra.mxu0 0.0
    %1370 = vmatprep.subr.mxu0 0.0
    %1371 = vmatpush1.msra.mxu0 0.0
    %1372 = vmatprep.mubr.f32.mxu0 0.0
    %1373 = vmatmul.mubr.f32.gmra.mrb[0].mxu0 %v1284
    %v1374 = vpop.f32.mrb[0].mxu0
    %v1375 = vadd.f32 %v1306, %v1374
    %v1376 = vpop.f32.mrb[0].mxu0
    %1377 = vdwg.mxu0
    %1378 = vst [vmem:[%s7] sm:$0xff] %v1375
  $region37: #{lstm_net_forward.1} parent=0 // pred_fallthru
    _
  // Predicated region
  $region38: #{lstm_net_forward.1} parent=0 // pred_check
    _
  $region39: #{lstm_net_forward.1} parent=0 // pred_check_branch
    %1380 = sbr.rel (0) target = $region41
  $region40: #{lstm_net_forward.1} parent=0 // pred_region
    _
  $region41: #{lstm_net_forward.1} parent=0 // pred_fallthru
    _
  // Predicated region
  $region42: #{lstm_net_forward.1} parent=0 // pred_check
    _
  $region43: #{lstm_net_forward.1} parent=0 // pred_check_branch
    %1382 = sbr.rel (0) target = $region45
  $region44: #{lstm_net_forward.1} parent=0 // pred_region
    _
  $region45: #{lstm_net_forward.1} parent=0 // pred_fallthru
    _

</llo_original>
